<compile_context>
chip_gen: v5e
topology: v5e:2x2
jax: 0.10.0
libtpu: 0.0.40
codegen_flags: <defaults>
</compile_context>

<pallas_src>
import math

import jax
import jax.numpy as jnp
from jax.experimental import pallas as pl
from jax.experimental.pallas import tpu as pltpu


def get_same_padding(size, kernel, dilation, stride):
    return ((size - 1) * (stride - 1) + dilation * (kernel - 1)) // 2


def _round_up(x, m):
    return ((x + m - 1) // m) * m


def _vmem_capacity_bytes():
    try:
        return int(pltpu.get_tpu_info().vmem_capacity_bytes)
    except Exception:
        return 64 << 20            # conservative fallback (v7x per-core VMEM)


def _pad_flatten_nchw(x, spad, w_extra, c_to, p_to, dtype):
    """(B,C,H,W) -> channel-padded, spatially padded, flattened (B, p_to, c_to).

    Rows are laid out with width Wp8 = W + 2*spad + w_extra (a multiple of 8)
    so the per-row tap offsets are sublane-aligned.
    """
    B, C, H, W = x.shape
    xp = jnp.pad(x.astype(dtype),
                 ((0, 0), (0, c_to - C), (spad, spad), (spad, spad + w_extra)))
    xp = jnp.transpose(xp, (0, 2, 3, 1))                  # (B, Hp, Wp8, c_to)
    xf = xp.reshape(B, xp.shape[1] * xp.shape[2], c_to)
    return jnp.pad(xf, ((0, 0), (0, p_to - xf.shape[1]), (0, 0)))


# ----------------------------------------------------------------------------
# Pallas kernel: AdaptiveConv2DMod (stride=1) + SiLU [+ fused 1x1 residual]
# ----------------------------------------------------------------------------
def _make_block_kernel(*, taps, fuse_res, res_off):
    def kernel(*refs):
        if fuse_res:
            w_ref, xin_ref, xres_ref, wres_ref, bres_ref, out_ref = refs
        else:
            w_ref, xin_ref, out_ref = refs

        ltile = out_ref.shape[1]
        col0 = pl.multiple_of(pl.program_id(1) * ltile, 128)

        # K*K accumulating MXU dots straight off the resident padded slab
        # (no materialized im2col); f32 accumulation, operands in input dtype.
        acc = None
        for j, off in enumerate(taps):
            xw = xin_ref[0, pl.ds(col0 + off, ltile), :]          # (ltile, C)
            part = jnp.dot(xw, w_ref[0, j],
                           preferred_element_type=jnp.float32)    # (ltile, O)
            acc = part if acc is None else acc + part

        # SiLU = x * sigmoid(x); sigmoid via the EUP tanh (no VALU divide).
        acc = acc * (0.5 * jnp.tanh(0.5 * acc) + 0.5)

        if fuse_res:                                              # + res_conv(x)
            xr = xres_ref[0, pl.ds(col0 + res_off, ltile), :]
            acc = acc + jnp.dot(xr, wres_ref[...],
                                preferred_element_type=jnp.float32)
            acc = acc + bres_ref[...]                             # (1, O) bias

        out_ref[0] = acc.astype(out_ref.dtype)

    return kernel


# ----------------------------------------------------------------------------
# Wrapper for one Block (AdaptiveConv2DMod + SiLU [+ fused residual])
# ----------------------------------------------------------------------------
def adaptive_conv_silu_block(fmap, mod, kernel_mod, weights, *,
                             demod=True, eps=1e-8, dilation=1,
                             ltile=None, residual=None, mxu_dtype=None):
    B, Cin, H, W = fmap.shape
    N, O, Cin2, K, K2 = weights.shape
    assert Cin2 == Cin and K2 == K

    # PyTorch-style broadcast when mods come with a smaller batch.
    if mod.shape[0] != B:
        mod = jnp.tile(mod, (B // mod.shape[0], 1))
    if kernel_mod is not None and kernel_mod.shape[0] != B:
        kernel_mod = jnp.tile(kernel_mod, (B // kernel_mod.shape[0], 1))

    out_dt = fmap.dtype
    cdt = jnp.dtype(mxu_dtype) if mxu_dtype is not None else fmap.dtype
    isz_c = jnp.dtype(cdt).itemsize
    isz_o = jnp.dtype(out_dt).itemsize

    pad = get_same_padding(H, K, dilation, 1)     # stride == 1 in ResnetBlock
    Hp = H + 2 * pad
    Wp = W + 2 * pad
    Wp8 = _round_up(Wp, 8)                        # sublane-aligned row stride
    Hout = H + 2 * pad - dilation * (K - 1)
    Wout = W + 2 * pad - dilation * (K - 1)
    KK = K * K

    # Lane-width channel padding (lane-dense stores, no cross-lane shuffles).
    C128 = max(128, _round_up(Cin, 128))
    O128 = max(128, _round_up(O, 128))

    fuse_res = residual is not None
    if fuse_res:
        xres, wres, bres = residual
        assert xres.shape[0] == B and xres.shape[-2:] == (H, W)
        Cr = xres.shape[1]
        Cr128 = max(128, _round_up(Cr, 128))
    else:
        Cr128 = 0

    max_off = dilation * (K - 1) * (Wp8 + 1)          # largest tap offset
    L_valid = (Hout - 1) * Wp8 + Wout                 # span of valid out cols
    vmem_cap = _vmem_capacity_bytes()
    SINGLE_BUF_THRESH = 4 << 20                       # single-buffer big slabs

    def plan(lt):
        n_t = -(-L_valid // lt)
        Lout = n_t * lt
        Pflat = _round_up(max(Hp * Wp8, Lout + max_off), 8)
        slab_b = Pflat * C128 * isz_c
        w_b = KK * C128 * O128 * isz_c
        slab_sbuf = slab_b > SINGLE_BUF_THRESH
        w_sbuf = w_b > SINGLE_BUF_THRESH
        need = (1 if slab_sbuf else 2) * slab_b
        need += (1 if w_sbuf else 2) * w_b
        need += 2 * lt * O128 * isz_o
        if fuse_res:
            need += (1 if slab_sbuf else 2) * Pflat * Cr128 * isz_c
            need += 2 * (Cr128 * O128 * isz_c + O128 * 4)
        return n_t, Lout, Pflat, slab_sbuf, w_sbuf, need

    if ltile is None:
        # Biggest spatial tile that fits comfortably in this generation's VMEM
        # (amortizes per-grid-step overhead, taller M for the MXU).
        lv128 = _round_up(L_valid, 128)
        ltile = 128
        for cand in (2048, 1024, 512, 256, 128):
            lt = min(cand, lv128)
            if plan(lt)[-1] <= int(0.7 * vmem_cap):
                ltile = lt
                break
    assert ltile % 128 == 0
    n_t, Lout, Pflat, slab_sbuf, w_sbuf, need = plan(ltile)

    # -- glue: per-batch softmax-mixed + (mod+1)-scaled + demodulated weight,
    #    computed in f32 in the wrapper (free XLA fusion), cast to the compute
    #    dtype, laid out (B, K*K, C128, O128) tap-major. --
    w32 = weights.astype(jnp.float32)
    if kernel_mod is not None and N > 1:
        attn = jax.nn.softmax(kernel_mod.astype(jnp.float32), axis=-1)
        wmix = jnp.einsum('bn,noikl->boikl', attn, w32,
                          precision=jax.lax.Precision.HIGHEST)
    else:
        wmix = jnp.broadcast_to(w32[0], (B,) + w32.shape[1:])
    wmix = wmix * (mod.astype(jnp.float32)[:, None, :, None, None] + 1.0)
    if demod:
        ssq = jnp.sum(wmix * wmix, axis=(2, 3, 4), keepdims=True)
        wmix = wmix * jax.lax.rsqrt(jnp.maximum(ssq, eps))
    wmix = jnp.pad(wmix, ((0, 0), (0, O128 - O), (0, C128 - Cin),
                          (0, 0), (0, 0)))
    wmix = jnp.transpose(wmix, (0, 3, 4, 2, 1)).reshape(B, KK, C128, O128)
    wmix = wmix.astype(cdt)

    # -- glue: padded/flattened input slab, DMA'd once per batch, resident
    #    across the whole spatial-tile axis (constant index_map over t). --
    xflat = _pad_flatten_nchw(fmap, pad, Wp8 - Wp, C128, Pflat, cdt)

    taps = tuple(ky * dilation * Wp8 + kx * dilation
                 for ky in range(K) for kx in range(K))
    res_off = pad * (Wp8 + 1)

    def _spec(shape, index_map, single):
        if single:
            return pl.BlockSpec(shape, index_map, pipeline_mode=pl.Buffered(1))
        return pl.BlockSpec(shape, index_map)

    in_specs = [
        _spec((1, KK, C128, O128), lambda b, t: (b, 0, 0, 0), w_sbuf),
        _spec((1, Pflat, C128), lambda b, t: (b, 0, 0), slab_sbuf),
    ]
    args = [wmix, xflat]

    if fuse_res:
        xres_f = _pad_flatten_nchw(xres, pad, Wp8 - Wp, Cr128, Pflat, cdt)
        wres_p = jnp.pad(jnp.transpose(wres, (1, 0)),
                         ((0, Cr128 - Cr), (0, O128 - O))).astype(cdt)
        bres_p = jnp.pad(bres.astype(jnp.float32),
                         (0, O128 - O)).reshape(1, O128)
        in_specs += [
            _spec((1, Pflat, Cr128), lambda b, t: (b, 0, 0), slab_sbuf),
            pl.BlockSpec((Cr128, O128), lambda b, t: (0, 0)),
            pl.BlockSpec((1, O128), lambda b, t: (0, 0)),
        ]
        args += [xres_f, wres_p, bres_p]

    kernel = _make_block_kernel(taps=taps, fuse_res=fuse_res, res_off=res_off)

    # Generation-aware VMEM budget: real need + headroom, capped at ~90% of
    # this chip's VMEM (no hard 64 MiB clamp).
    vmem_limit = int(min(max(need + max(need // 2, 8 << 20), 32 << 20),
                         int(0.9 * vmem_cap)))

    out_flat = pl.pallas_call(
        kernel,
        out_shape=jax.ShapeDtypeStruct((B, Lout, O128), out_dt),
        grid=(B, n_t),
        in_specs=in_specs,
        out_specs=pl.BlockSpec((1, ltile, O128), lambda b, t: (b, t, 0)),
        compiler_params=pltpu.CompilerParams(
            # No cross-tile state anymore (modulation hoisted), so both axes
            # are parallel: lets v7x shard single-image work over its 2 TCs.
            dimension_semantics=("parallel", "parallel"),
            vmem_limit_bytes=vmem_limit),
    )(*args)

    # glue: drop padding columns / channels, back to NCHW.
    need_cols = Hout * Wp8
    if Lout < need_cols:
        out_flat = jnp.pad(out_flat, ((0, 0), (0, need_cols - Lout), (0, 0)))
    out = out_flat[:, :need_cols, :].reshape(B, Hout, Wp8, O128)
    out = out[:, :, :Wout, :O]
    return jnp.transpose(out, (0, 3, 1, 2)).astype(out_dt)


# ----------------------------------------------------------------------------
# ResnetBlock forward (Pallas path)
# ----------------------------------------------------------------------------
def resnet_block_forward(x, w1, w2, wres, bres, mod1, km1, mod2, km2, *,
                         eps=1e-8, ltile=None, mxu_dtype=None):
    """h = SiLU(AConv1(x)); h = SiLU(AConv2(h)); return h + res_conv(x)."""
    dim_out = w1.shape[1]
    if wres is None:                   # nn.Identity residual (dim == dim_out)
        wres = jnp.eye(dim_out, x.shape[1], dtype=jnp.float32)
        bres = jnp.zeros((dim_out,), jnp.float32)
    h = adaptive_conv_silu_block(x, mod1, km1, w1, eps=eps, ltile=ltile,
                                 mxu_dtype=mxu_dtype)
    out = adaptive_conv_silu_block(h, mod2, km2, w2, eps=eps, ltile=ltile,
                                   mxu_dtype=mxu_dtype,
                                   residual=(x, wres, bres))
    return out


# ----------------------------------------------------------------------------
# Pure-JAX reference (matches the PyTorch forward)
# ----------------------------------------------------------------------------
def _ref_adaptive_conv(fmap, mod, kernel_mod, weights, *, demod=True, eps=1e-8,
                       stride=1, dilation=1):
    B = fmap.shape[0]
    K = weights.shape[-1]
    H = fmap.shape[-2]
    if kernel_mod is not None and weights.shape[0] > 1:
        attn = jax.nn.softmax(kernel_mod, axis=-1)
        w = jnp.einsum('noikl,bn->boikl', weights, attn,
                       precision=jax.lax.Precision.HIGHEST)
    else:
        w = jnp.broadcast_to(weights[0], (B,) + weights.shape[1:])
    w = w * (mod[:, None, :, None, None] + 1.0)
    if demod:
        inv = jax.lax.rsqrt(jnp.maximum(
            jnp.sum(w * w, axis=(2, 3, 4), keepdims=True), eps))
        w = w * inv
    pad = get_same_padding(H, K, dilation, stride)
    x = fmap.reshape(1, -1, fmap.shape[2], fmap.shape[3])
    wf = w.reshape(-1, w.shape[2], w.shape[3], w.shape[4])
    out = jax.lax.conv_general_dilated(
        x, wf, window_strides=(stride, stride),
        padding=[(pad, pad), (pad, pad)],
        rhs_dilation=(dilation, dilation),
        dimension_numbers=('NCHW', 'OIHW', 'NCHW'),
        feature_group_count=B,
        precision=jax.lax.Precision.HIGHEST)
    return out.reshape(B, -1, out.shape[2], out.shape[3])


def _silu(x):
    return x * jax.nn.sigmoid(x)


def ref_resnet_block(x, w1, w2, wres, bres, mod1, km1, mod2, km2, *, eps=1e-8):
    h = _silu(_ref_adaptive_conv(x, mod1, km1, w1, eps=eps))
    h = _silu(_ref_adaptive_conv(h, mod2, km2, w2, eps=eps))
    if wres is None:
        res = x
    else:
        res = jnp.einsum('oi,bihw->bohw', wres, x,
                         precision=jax.lax.Precision.HIGHEST)
        res = res + bres[None, :, None, None]
    return h + res


if __name__ == "__main__":
    # ResnetBlock config: adaptive path (num_conv_kernels > 1), dim != dim_out.
    B, dim, dim_out, H, W = 2, 4, 8, 16, 16
    K, N = 3, 4

    key = jax.random.PRNGKey(0)
    ks = jax.random.split(key, 9)

    def kaiming(k, shape):
        # torch kaiming_normal_(a=0, mode='fan_in', leaky_relu) on a 5D tensor
        fan_in = shape[1] * math.prod(shape[2:])
        std = math.sqrt(2.0) / math.sqrt(fan_in)
        return std * jax.random.normal(k, shape, jnp.float32)

    w1 = kaiming(ks[0], (N, dim_out, dim, K, K))
    w2 = kaiming(ks[1], (N, dim_out, dim_out, K, K))
    wres = jax.random.normal(ks[2], (dim_out, dim), jnp.float32) / math.sqrt(dim)
    bres = 0.1 * jax.random.normal(ks[3], (dim_out,), jnp.float32)

    x = jax.random.normal(ks[4], (B, dim, H, W), jnp.float32)
    mod1 = jax.random.normal(ks[5], (B, dim), jnp.float32)
    km1 = jax.random.normal(ks[6], (B, N), jnp.float32)
    mod2 = jax.random.normal(ks[7], (B, dim_out), jnp.float32)
    km2 = jax.random.normal(ks[8], (B, N), jnp.float32)

    ref = jax.block_until_ready(
        ref_resnet_block(x, w1, w2, wres, bres, mod1, km1, mod2, km2))

    # f32 path; ltile=128 exercises the (batch, spatial-tile) grid.
    out = jax.block_until_ready(
        resnet_block_forward(x, w1, w2, wres, bres, mod1, km1, mod2, km2,
                             ltile=128))
    assert out.shape == (B, dim_out, H, W), out.shape
    err = float(jnp.max(jnp.abs(out - ref)))
    assert err < 5e-3, f"f32 mismatch vs reference, max abs err = {err}"

    # bf16 MXU path with automatic ltile / VMEM selection (looser tolerance:
    # bf16 operand rounding through two conv blocks + bf16 output).
    out_bf = jax.block_until_ready(
        resnet_block_forward(x.astype(jnp.bfloat16), w1, w2, wres, bres,
                             mod1, km1, mod2, km2))
    err_bf = float(jnp.max(jnp.abs(out_bf.astype(jnp.float32) - ref)))
    assert err_bf < 2e-1, f"bf16 mismatch vs reference, max abs err = {err_bf}"

    print("KERNEL_OK")
</pallas_src>

<mosaic_0001>
module attributes {stable_mosaic.version = 11 : i64} {
  func.func @kernel(%arg0: i32, %arg1: i32, %arg2: memref<1x9x128x128xf32, #tpu.memory_space<vmem>>, %arg3: memref<1x440x128xf32, #tpu.memory_space<vmem>>, %arg4: memref<1x128x128xf32, #tpu.memory_space<vmem>>) attributes {dimension_semantics = [#tpu.dimension_semantics<parallel>, #tpu.dimension_semantics<parallel>], iteration_bounds = array<i64: 2, 3>, scalar_prefetch = 0 : i64, scratch_operands = 0 : i64, tpu.core_type = #tpu.core_type<tc>, window_params = [{transform_indices = @transform_0, window_bounds = array<i64: 1, 9, 128, 128>}, {transform_indices = @transform_1, window_bounds = array<i64: 1, 440, 128>}, {transform_indices = @transform_2, window_bounds = array<i64: 1, 128, 128>}]} {
    %c128_i32 = arith.constant 128 : i32
    %0 = arith.muli %arg1, %c128_i32 : i32
    %1 = tpu.assume_multiple %0, 128 : i32
    %c0_i32 = arith.constant 0 : i32
    %2 = arith.addi %1, %c0_i32 : i32
    %c0 = arith.constant 0 : index
    %3 = arith.index_cast %2 : i32 to index
    %c0_0 = arith.constant 0 : index
    %4 = vector.load %arg3[%c0, %3, %c0_0] : memref<1x440x128xf32, #tpu.memory_space<vmem>>, vector<1x128x128xf32>
    %5 = vector.shape_cast %4 : vector<1x128x128xf32> to vector<128x128xf32>
    %c0_1 = arith.constant 0 : index
    %c0_2 = arith.constant 0 : index
    %c0_3 = arith.constant 0 : index
    %c0_4 = arith.constant 0 : index
    %6 = vector.load %arg2[%c0_1, %c0_2, %c0_3, %c0_4] : memref<1x9x128x128xf32, #tpu.memory_space<vmem>>, vector<1x1x128x128xf32>
    %7 = vector.shape_cast %6 : vector<1x1x128x128xf32> to vector<128x128xf32>
    %cst = arith.constant dense<0.000000e+00> : vector<128x128xf32>
    %8 = tpu.matmul %5, %7, %cst {dimension_numbers = #tpu.dot_dimension_numbers<[1], [0], [0], [1], [0, 0, 1, 1], [], []>} : vector<128x128xf32>, vector<128x128xf32>, vector<128x128xf32> -> vector<128x128xf32>
    %c1_i32 = arith.constant 1 : i32
    %9 = arith.addi %1, %c1_i32 : i32
    %c0_5 = arith.constant 0 : index
    %10 = arith.index_cast %9 : i32 to index
    %c0_6 = arith.constant 0 : index
    %11 = vector.load %arg3[%c0_5, %10, %c0_6] : memref<1x440x128xf32, #tpu.memory_space<vmem>>, vector<1x128x128xf32>
    %12 = vector.shape_cast %11 : vector<1x128x128xf32> to vector<128x128xf32>
    %c0_7 = arith.constant 0 : index
    %c1 = arith.constant 1 : index
    %c0_8 = arith.constant 0 : index
    %c0_9 = arith.constant 0 : index
    %13 = vector.load %arg2[%c0_7, %c1, %c0_8, %c0_9] : memref<1x9x128x128xf32, #tpu.memory_space<vmem>>, vector<1x1x128x128xf32>
    %14 = vector.shape_cast %13 : vector<1x1x128x128xf32> to vector<128x128xf32>
    %cst_10 = arith.constant dense<0.000000e+00> : vector<128x128xf32>
    %15 = tpu.matmul %12, %14, %cst_10 {dimension_numbers = #tpu.dot_dimension_numbers<[1], [0], [0], [1], [0, 0, 1, 1], [], []>} : vector<128x128xf32>, vector<128x128xf32>, vector<128x128xf32> -> vector<128x128xf32>
    %16 = arith.addf %8, %15 : vector<128x128xf32>
    %c2_i32 = arith.constant 2 : i32
    %17 = arith.addi %1, %c2_i32 : i32
    %c0_11 = arith.constant 0 : index
    %18 = arith.index_cast %17 : i32 to index
    %c0_12 = arith.constant 0 : index
    %19 = vector.load %arg3[%c0_11, %18, %c0_12] : memref<1x440x128xf32, #tpu.memory_space<vmem>>, vector<1x128x128xf32>
    %20 = vector.shape_cast %19 : vector<1x128x128xf32> to vector<128x128xf32>
    %c0_13 = arith.constant 0 : index
    %c2 = arith.constant 2 : index
    %c0_14 = arith.constant 0 : index
    %c0_15 = arith.constant 0 : index
    %21 = vector.load %arg2[%c0_13, %c2, %c0_14, %c0_15] : memref<1x9x128x128xf32, #tpu.memory_space<vmem>>, vector<1x1x128x128xf32>
    %22 = vector.shape_cast %21 : vector<1x1x128x128xf32> to vector<128x128xf32>
    %cst_16 = arith.constant dense<0.000000e+00> : vector<128x128xf32>
    %23 = tpu.matmul %20, %22, %cst_16 {dimension_numbers = #tpu.dot_dimension_numbers<[1], [0], [0], [1], [0, 0, 1, 1], [], []>} : vector<128x128xf32>, vector<128x128xf32>, vector<128x128xf32> -> vector<128x128xf32>
    %24 = arith.addf %16, %23 : vector<128x128xf32>
    %c24_i32 = arith.constant 24 : i32
    %25 = arith.addi %1, %c24_i32 : i32
    %c0_17 = arith.constant 0 : index
    %26 = arith.index_cast %25 : i32 to index
    %c0_18 = arith.constant 0 : index
    %27 = vector.load %arg3[%c0_17, %26, %c0_18] : memref<1x440x128xf32, #tpu.memory_space<vmem>>, vector<1x128x128xf32>
    %28 = vector.shape_cast %27 : vector<1x128x128xf32> to vector<128x128xf32>
    %c0_19 = arith.constant 0 : index
    %c3 = arith.constant 3 : index
    %c0_20 = arith.constant 0 : index
    %c0_21 = arith.constant 0 : index
    %29 = vector.load %arg2[%c0_19, %c3, %c0_20, %c0_21] : memref<1x9x128x128xf32, #tpu.memory_space<vmem>>, vector<1x1x128x128xf32>
    %30 = vector.shape_cast %29 : vector<1x1x128x128xf32> to vector<128x128xf32>
    %cst_22 = arith.constant dense<0.000000e+00> : vector<128x128xf32>
    %31 = tpu.matmul %28, %30, %cst_22 {dimension_numbers = #tpu.dot_dimension_numbers<[1], [0], [0], [1], [0, 0, 1, 1], [], []>} : vector<128x128xf32>, vector<128x128xf32>, vector<128x128xf32> -> vector<128x128xf32>
    %32 = arith.addf %24, %31 : vector<128x128xf32>
    %c25_i32 = arith.constant 25 : i32
    %33 = arith.addi %1, %c25_i32 : i32
    %c0_23 = arith.constant 0 : index
    %34 = arith.index_cast %33 : i32 to index
    %c0_24 = arith.constant 0 : index
    %35 = vector.load %arg3[%c0_23, %34, %c0_24] : memref<1x440x128xf32, #tpu.memory_space<vmem>>, vector<1x128x128xf32>
    %36 = vector.shape_cast %35 : vector<1x128x128xf32> to vector<128x128xf32>
    %c0_25 = arith.constant 0 : index
    %c4 = arith.constant 4 : index
    %c0_26 = arith.constant 0 : index
    %c0_27 = arith.constant 0 : index
    %37 = vector.load %arg2[%c0_25, %c4, %c0_26, %c0_27] : memref<1x9x128x128xf32, #tpu.memory_space<vmem>>, vector<1x1x128x128xf32>
    %38 = vector.shape_cast %37 : vector<1x1x128x128xf32> to vector<128x128xf32>
    %cst_28 = arith.constant dense<0.000000e+00> : vector<128x128xf32>
    %39 = tpu.matmul %36, %38, %cst_28 {dimension_numbers = #tpu.dot_dimension_numbers<[1], [0], [0], [1], [0, 0, 1, 1], [], []>} : vector<128x128xf32>, vector<128x128xf32>, vector<128x128xf32> -> vector<128x128xf32>
    %40 = arith.addf %32, %39 : vector<128x128xf32>
    %c26_i32 = arith.constant 26 : i32
    %41 = arith.addi %1, %c26_i32 : i32
    %c0_29 = arith.constant 0 : index
    %42 = arith.index_cast %41 : i32 to index
    %c0_30 = arith.constant 0 : index
    %43 = vector.load %arg3[%c0_29, %42, %c0_30] : memref<1x440x128xf32, #tpu.memory_space<vmem>>, vector<1x128x128xf32>
    %44 = vector.shape_cast %43 : vector<1x128x128xf32> to vector<128x128xf32>
    %c0_31 = arith.constant 0 : index
    %c5 = arith.constant 5 : index
    %c0_32 = arith.constant 0 : index
    %c0_33 = arith.constant 0 : index
    %45 = vector.load %arg2[%c0_31, %c5, %c0_32, %c0_33] : memref<1x9x128x128xf32, #tpu.memory_space<vmem>>, vector<1x1x128x128xf32>
    %46 = vector.shape_cast %45 : vector<1x1x128x128xf32> to vector<128x128xf32>
    %cst_34 = arith.constant dense<0.000000e+00> : vector<128x128xf32>
    %47 = tpu.matmul %44, %46, %cst_34 {dimension_numbers = #tpu.dot_dimension_numbers<[1], [0], [0], [1], [0, 0, 1, 1], [], []>} : vector<128x128xf32>, vector<128x128xf32>, vector<128x128xf32> -> vector<128x128xf32>
    %48 = arith.addf %40, %47 : vector<128x128xf32>
    %c48_i32 = arith.constant 48 : i32
    %49 = arith.addi %1, %c48_i32 : i32
    %c0_35 = arith.constant 0 : index
    %50 = arith.index_cast %49 : i32 to index
    %c0_36 = arith.constant 0 : index
    %51 = vector.load %arg3[%c0_35, %50, %c0_36] : memref<1x440x128xf32, #tpu.memory_space<vmem>>, vector<1x128x128xf32>
    %52 = vector.shape_cast %51 : vector<1x128x128xf32> to vector<128x128xf32>
    %c0_37 = arith.constant 0 : index
    %c6 = arith.constant 6 : index
    %c0_38 = arith.constant 0 : index
    %c0_39 = arith.constant 0 : index
    %53 = vector.load %arg2[%c0_37, %c6, %c0_38, %c0_39] : memref<1x9x128x128xf32, #tpu.memory_space<vmem>>, vector<1x1x128x128xf32>
    %54 = vector.shape_cast %53 : vector<1x1x128x128xf32> to vector<128x128xf32>
    %cst_40 = arith.constant dense<0.000000e+00> : vector<128x128xf32>
    %55 = tpu.matmul %52, %54, %cst_40 {dimension_numbers = #tpu.dot_dimension_numbers<[1], [0], [0], [1], [0, 0, 1, 1], [], []>} : vector<128x128xf32>, vector<128x128xf32>, vector<128x128xf32> -> vector<128x128xf32>
    %56 = arith.addf %48, %55 : vector<128x128xf32>
    %c49_i32 = arith.constant 49 : i32
    %57 = arith.addi %1, %c49_i32 : i32
    %c0_41 = arith.constant 0 : index
    %58 = arith.index_cast %57 : i32 to index
    %c0_42 = arith.constant 0 : index
    %59 = vector.load %arg3[%c0_41, %58, %c0_42] : memref<1x440x128xf32, #tpu.memory_space<vmem>>, vector<1x128x128xf32>
    %60 = vector.shape_cast %59 : vector<1x128x128xf32> to vector<128x128xf32>
    %c0_43 = arith.constant 0 : index
    %c7 = arith.constant 7 : index
    %c0_44 = arith.constant 0 : index
    %c0_45 = arith.constant 0 : index
    %61 = vector.load %arg2[%c0_43, %c7, %c0_44, %c0_45] : memref<1x9x128x128xf32, #tpu.memory_space<vmem>>, vector<1x1x128x128xf32>
    %62 = vector.shape_cast %61 : vector<1x1x128x128xf32> to vector<128x128xf32>
    %cst_46 = arith.constant dense<0.000000e+00> : vector<128x128xf32>
    %63 = tpu.matmul %60, %62, %cst_46 {dimension_numbers = #tpu.dot_dimension_numbers<[1], [0], [0], [1], [0, 0, 1, 1], [], []>} : vector<128x128xf32>, vector<128x128xf32>, vector<128x128xf32> -> vector<128x128xf32>
    %64 = arith.addf %56, %63 : vector<128x128xf32>
    %c50_i32 = arith.constant 50 : i32
    %65 = arith.addi %1, %c50_i32 : i32
    %c0_47 = arith.constant 0 : index
    %66 = arith.index_cast %65 : i32 to index
    %c0_48 = arith.constant 0 : index
    %67 = vector.load %arg3[%c0_47, %66, %c0_48] : memref<1x440x128xf32, #tpu.memory_space<vmem>>, vector<1x128x128xf32>
    %68 = vector.shape_cast %67 : vector<1x128x128xf32> to vector<128x128xf32>
    %c0_49 = arith.constant 0 : index
    %c8 = arith.constant 8 : index
    %c0_50 = arith.constant 0 : index
    %c0_51 = arith.constant 0 : index
    %69 = vector.load %arg2[%c0_49, %c8, %c0_50, %c0_51] : memref<1x9x128x128xf32, #tpu.memory_space<vmem>>, vector<1x1x128x128xf32>
    %70 = vector.shape_cast %69 : vector<1x1x128x128xf32> to vector<128x128xf32>
    %cst_52 = arith.constant dense<0.000000e+00> : vector<128x128xf32>
    %71 = tpu.matmul %68, %70, %cst_52 {dimension_numbers = #tpu.dot_dimension_numbers<[1], [0], [0], [1], [0, 0, 1, 1], [], []>} : vector<128x128xf32>, vector<128x128xf32>, vector<128x128xf32> -> vector<128x128xf32>
    %72 = arith.addf %64, %71 : vector<128x128xf32>
    %cst_53 = arith.constant 5.000000e-01 : f32
    %73 = vector.broadcast %cst_53 : f32 to vector<128x128xf32>
    %74 = arith.mulf %73, %72 : vector<128x128xf32>
    %75 = math.tanh %74 : vector<128x128xf32>
    %cst_54 = arith.constant 5.000000e-01 : f32
    %76 = vector.broadcast %cst_54 : f32 to vector<128x128xf32>
    %77 = arith.mulf %76, %75 : vector<128x128xf32>
    %cst_55 = arith.constant 5.000000e-01 : f32
    %78 = vector.broadcast %cst_55 : f32 to vector<128x128xf32>
    %79 = arith.addf %77, %78 : vector<128x128xf32>
    %80 = arith.mulf %72, %79 : vector<128x128xf32>
    %c0_56 = arith.constant 0 : index
    %c0_57 = arith.constant 0 : index
    %c0_58 = arith.constant 0 : index
    %81 = vector.load %arg4[%c0_56, %c0_57, %c0_58] : memref<1x128x128xf32, #tpu.memory_space<vmem>>, vector<1x128x128xf32>
    %82 = vector.shape_cast %81 : vector<1x128x128xf32> to vector<128x128xf32>
    %83 = vector.shape_cast %80 : vector<128x128xf32> to vector<1x128x128xf32>
    tpu.vector_store %arg4[%c0_56, %c0_57, %c0_58], %83 {strides = array<i32>} : memref<1x128x128xf32, #tpu.memory_space<vmem>>, vector<1x128x128xf32>,
    return
  }
  func.func @transform_0(%arg0: i32, %arg1: i32) -> (i32, i32, i32, i32) {
    %c0_i32 = arith.constant 0 : i32
    %c0_i32_0 = arith.constant 0 : i32
    %c0_i32_1 = arith.constant 0 : i32
    %c0_i32_2 = arith.constant 0 : i32
    return %arg0, %c0_i32, %c0_i32_0, %c0_i32_1 : i32, i32, i32, i32
  }
  func.func @transform_1(%arg0: i32, %arg1: i32) -> (i32, i32, i32) {
    %c0_i32 = arith.constant 0 : i32
    %c0_i32_0 = arith.constant 0 : i32
    %c0_i32_1 = arith.constant 0 : i32
    return %arg0, %c0_i32, %c0_i32_0 : i32, i32, i32
  }
  func.func @transform_2(%arg0: i32, %arg1: i32) -> (i32, i32, i32) {
    %c0_i32 = arith.constant 0 : i32
    %c0_i32_0 = arith.constant 0 : i32
    return %arg0, %arg1, %c0_i32 : i32, i32, i32
  }
}

</mosaic_0001>

<llo_original>
// kernel: tpu_custom_call.1
$region0: #{tpu_custom_call.1}
  #allocation0 [shape = 'u32[]', space=smem, size = 0x4, offset = 0x4, fixed_abs, tag = 'smem constant byte address 0x4 - core index']
  #allocation1 [shape = 'u32[72,128]{1,0:T(1,128)}', space=vmem, size = 0x9000, scoped, tag = 'internal scratch']
  %s0 = inlined_call_operand.hbm [shape: f32[2,9,128,128], index: 0, kind: input, shape index: {}]
  %s1 = inlined_call_operand.hbm [shape: f32[2,440,128], index: 1, kind: input, shape index: {}]
  %s2 = inlined_call_operand.hbm [shape: f32[2,384,128], index: 2, kind: output, shape index: {}]
  %s3 = sld [smem:[#allocation0]]
  $region49: #{tpu_custom_call.1} parent=0
    _
  %s5 = ssub.s32 1, %s3
  %s6 = scalar_select 0, %s5, %s3
  $region1: #{tpu_custom_call.1} parent=0
    #allocation2 [shape = 'u8[1179648]{0}', space=vmem, size = 0x120000, scoped, tag = 'input window, operand 0']
    #allocation3 [shape = 's32[2]{0}', space=sflag, size = 0x8, scoped, tag = 'scoped memory for tpu_custom_call.1']
    #allocation4 [shape = 's32[2]{0}', space=sflag, size = 0x8, scoped, tag = 'scoped memory for tpu_custom_call.1']
    #allocation5 [shape = 'u8[450560]{0}', space=vmem, size = 0x6e000, scoped, tag = 'input window, operand 1']
    #allocation6 [shape = 's32[2]{0}', space=sflag, size = 0x8, scoped, tag = 'scoped memory for tpu_custom_call.1']
    #allocation7 [shape = 'u8[131072]{0}', space=vmem, size = 0x20000, scoped, tag = 'output window, operand 0']
    %7 = vsyncpa [#allocation3], 0
    %s8 = scalar_lea.sflag [#allocation3], 1
    %9 = vsyncpa %s8, 0
    %10 = vsyncpa [#allocation6], 0
    %s11 = scalar_lea.sflag [#allocation6], 1
    %12 = vsyncpa %s11, 0
    %13 = vsyncpa [#allocation4], 0
    %s14 = scalar_lea.sflag [#allocation4], 1
    %15 = vsyncpa %s14, 0
    loop: start=0, step=1, limit=8
    $region2: #{tpu_custom_call.1} parent=1 // loop_pre_header
      _
    $region3: #{tpu_custom_call.1} parent=1 // loop_header
      %s17 = sphi 0, %s21
      %p18 = scmp.ge.s32.totalorder %s17, 8
      %s24 = sphi 0, %s36
      %s25 = sphi 0, %s32
      %s26 = sphi 0, %s24
      %s27 = sphi 0, %s25
      %s28 = sphi 0, %s26
      %s29 = sphi 0, %s27
      %s39 = sphi 0, %s41
      %s42 = sphi 0, %s39
      %s43 = sphi 0, %s42
      %s59 = sphi 0, %s43
      %s65 = sphi 0, %s67
      %s68 = sphi 0, %s65
      %s69 = sphi 0, %s68
      %s85 = sphi 0, %s69
      %s93 = sphi 0, %s95
      %s96 = sphi 0, %s93
      %s97 = sphi 0, %s96
      %s113 = sphi 0, %s97
    $region4: #{tpu_custom_call.1} parent=1 // loop_header_branch
      %20 = sbr.rel (%p18) target = $region8
    $region5: #{tpu_custom_call.1} parent=1 // loop_body
      %s22 = ssub.s32 %s17, 1
      %s23 = ssub.s32 %s17, 2
      %s30 = sadd.s32 1, %s25
      %p31 = scmp.ge.s32.totalorder %s30, 3
      %s32 = scalar_select %p31, 0, %s30
      %s33 = sadd.s32 1, %s24
      %s34 = scalar_select %p31, %s33, %s24
      %p35 = scmp.ge.s32.totalorder %s34, 2
      %s36 = scalar_select %p35, 0, %s34
      %s37 = ssub.s32 %s24, %s36
      %p38 = scmp.eq.s32.totalorder %s37, 0
      %s40 = sadd.s32 %s39, 1
      %s41 = scalar_select %p38, %s39, %s40
      %p44 = pneg %p38
      %p45 = scmp.eq.s32.totalorder %s17, 5
      %p46 = por %p44, %p45
      %p47 = scmp.ne.s32.totalorder %s39, %s42
      %p48 = scmp.eq.s32.totalorder %s17, 0
      %p49 = por %p47, %p48
      %p50 = scmp.ne.s32.totalorder %s39, %s42
      %p51 = scmp.eq.s32.totalorder %s22, 5
      %p52 = por %p50, %p51
      %p53 = scmp.ne.s32.totalorder %s42, %s43
      %p54 = scmp.eq.s32.totalorder %s22, 0
      %p55 = por %p53, %p54
      %p56 = scmp.ne.s32.totalorder %s42, %s43
      %p57 = scmp.eq.s32.totalorder %s23, 5
      %p58 = por %p56, %p57
      %p60 = scmp.ne.s32.totalorder %s43, %s59
      %p61 = scmp.eq.s32.totalorder %s23, 0
      %p62 = por %p60, %p61
      %s63 = ssub.s32 %s24, %s36
      %p64 = scmp.eq.s32.totalorder %s63, 0
      %s66 = sadd.s32 %s65, 1
      %s67 = scalar_select %p64, %s65, %s66
      %p70 = pneg %p64
      %p71 = scmp.eq.s32.totalorder %s17, 5
      %p72 = por %p70, %p71
      %p73 = scmp.ne.s32.totalorder %s65, %s68
      %p74 = scmp.eq.s32.totalorder %s17, 0
      %p75 = por %p73, %p74
      %p76 = scmp.ne.s32.totalorder %s65, %s68
      %p77 = scmp.eq.s32.totalorder %s22, 5
      %p78 = por %p76, %p77
      %p79 = scmp.ne.s32.totalorder %s68, %s69
      %p80 = scmp.eq.s32.totalorder %s22, 0
      %p81 = por %p79, %p80
      %p82 = scmp.ne.s32.totalorder %s68, %s69
      %p83 = scmp.eq.s32.totalorder %s23, 5
      %p84 = por %p82, %p83
      %p86 = scmp.ne.s32.totalorder %s69, %s85
      %p87 = scmp.eq.s32.totalorder %s23, 0
      %p88 = por %p86, %p87
      %s89 = ssub.s32 %s24, %s36
      %s90 = ssub.s32 %s25, %s32
      %s91 = sor.u32 %s89, %s90
      %p92 = scmp.eq.s32.totalorder %s91, 0
      %s94 = sadd.s32 %s93, 1
      %s95 = scalar_select %p92, %s93, %s94
      %p98 = pneg %p92
      %p99 = scmp.eq.s32.totalorder %s17, 5
      %p100 = por %p98, %p99
      %p101 = scmp.ne.s32.totalorder %s93, %s96
      %p102 = scmp.eq.s32.totalorder %s17, 0
      %p103 = por %p101, %p102
      %p104 = scmp.ne.s32.totalorder %s93, %s96
      %p105 = scmp.eq.s32.totalorder %s22, 5
      %p106 = por %p104, %p105
      %p107 = scmp.ne.s32.totalorder %s96, %s97
      %p108 = scmp.eq.s32.totalorder %s22, 0
      %p109 = por %p107, %p108
      %p110 = scmp.ne.s32.totalorder %s96, %s97
      %p111 = scmp.eq.s32.totalorder %s23, 5
      %p112 = por %p110, %p111
      %p114 = scmp.ne.s32.totalorder %s97, %s113
      %p115 = scmp.eq.s32.totalorder %s23, 0
      %p116 = por %p114, %p115
      %p117 = scmp.le.s32.totalorder 1, %s17
      %p118 = scmp.lt.s32.totalorder %s17, 7
      %p119 = pnand %p117, %p118
      %p120 = pneg %p119
      // Predicated region
      $region9: #{tpu_custom_call.1} parent=5 // pred_check
        _
      $region10: #{tpu_custom_call.1} parent=5 // pred_check_branch
        %122 = sbr.rel (%p119) target = $region12
      $region11: #{tpu_custom_call.1} parent=5 // pred_region
        %s123 = ssub.s32 %s17, 1
      $region12: #{tpu_custom_call.1} parent=5 // pred_fallthru
        _
      %p124 = scmp.lt.s32.totalorder %s17, 6
      // Predicated region
      $region13: #{tpu_custom_call.1} parent=5 // pred_check
        %p125 = pneg %p124
      $region14: #{tpu_custom_call.1} parent=5 // pred_check_branch
        %127 = sbr.rel (%p125) target = $region16
      $region15: #{tpu_custom_call.1} parent=5 // pred_region
        // Predicated region
        $region17: #{tpu_custom_call.1} parent=15 // pred_check
          %p128 = pneg %p49
        $region18: #{tpu_custom_call.1} parent=15 // pred_check_branch
          %130 = sbr.rel (%p128) target = $region20
        $region19: #{tpu_custom_call.1} parent=15 // pred_region
          %s131 = sand.u32 %s39, 1
          %s132 = scalar_lea.sflag [#allocation3], %s131
          %s133 = sand.u32 %s39, 1
          %s134 = smul.addr %s133, 1152
          %s135 = scalar_lea.vmem [#allocation2], %s134
          %137 = vsyncadd %s132, 0
          %s138 = smul.addr %s24, 144
          %s139 = smul.addr %s138, 8
          %s140 = scalar_lea.hbm %s0, %s139
          %s141 = sshll.u32 %s140, 4
          %s142 = int_to_ptr.hbm [resolvable:$true] %s141
          %s143 = sshll.u32 %s135, 4
          %s144 = int_to_ptr.vmem [resolvable:$true] %s143
          %149 = dma.hbm_to_vmem [thread:$0]  %s142, 18432, %s144, %s132, 128, 128, 8
        $region20: #{tpu_custom_call.1} parent=15 // pred_fallthru
          _
        // Predicated region
        $region21: #{tpu_custom_call.1} parent=15 // pred_check
          %p150 = pneg %p75
        $region22: #{tpu_custom_call.1} parent=15 // pred_check_branch
          %152 = sbr.rel (%p150) target = $region24
        $region23: #{tpu_custom_call.1} parent=15 // pred_region
          %s153 = sand.u32 %s65, 1
          %s154 = scalar_lea.sflag [#allocation6], %s153
          %s155 = sand.u32 %s65, 1
          %s156 = smul.addr %s155, 440
          %s157 = scalar_lea.vmem [#allocation5], %s156
          %159 = vsyncadd %s154, 0
          %s160 = smul.addr %s24, 55
          %s161 = smul.addr %s160, 8
          %s162 = scalar_lea.hbm %s1, %s161
          %s163 = sshll.u32 %s162, 4
          %s164 = int_to_ptr.hbm [resolvable:$true] %s163
          %s165 = sshll.u32 %s157, 4
          %s166 = int_to_ptr.vmem [resolvable:$true] %s165
          %171 = dma.hbm_to_vmem [thread:$0]  %s164, 7040, %s166, %s154, 128, 128, 8
        $region24: #{tpu_custom_call.1} parent=15 // pred_fallthru
          _
      $region16: #{tpu_custom_call.1} parent=5 // pred_fallthru
        _
      %p172 = scmp.le.s32.totalorder 1, %s17
      %p173 = scmp.lt.s32.totalorder %s17, 7
      %p174 = pnand %p172, %p173
      %p175 = pneg %p174
      // Predicated region
      $region25: #{tpu_custom_call.1} parent=5 // pred_check
        _
      $region26: #{tpu_custom_call.1} parent=5 // pred_check_branch
        %177 = sbr.rel (%p174) target = $region28
      $region27: #{tpu_custom_call.1} parent=5 // pred_region
        %s178 = ssub.s32 %s17, 1
        %s179 = sand.u32 %s42, 1
        %s180 = scalar_lea.sflag [#allocation3], %s179
        %s181 = sand.u32 %s42, 1
        %s182 = smul.addr %s181, 1152
        %s183 = scalar_lea.vmem [#allocation2], %s182
        // Predicated region
        $region29: #{tpu_custom_call.1} parent=27 // pred_check
          %p184 = pneg %p55
        $region30: #{tpu_custom_call.1} parent=27 // pred_check_branch
          %186 = sbr.rel (%p184) target = $region32
        $region31: #{tpu_custom_call.1} parent=27 // pred_region
          %188 = dma.done %s180, 18432
        $region32: #{tpu_custom_call.1} parent=27 // pred_fallthru
          _
        %s189 = sand.u32 %s68, 1
        %s190 = scalar_lea.sflag [#allocation6], %s189
        %s191 = sand.u32 %s68, 1
        %s192 = smul.addr %s191, 440
        %s193 = scalar_lea.vmem [#allocation5], %s192
        // Predicated region
        $region33: #{tpu_custom_call.1} parent=27 // pred_check
          %p194 = pneg %p81
        $region34: #{tpu_custom_call.1} parent=27 // pred_check_branch
          %196 = sbr.rel (%p194) target = $region36
        $region35: #{tpu_custom_call.1} parent=27 // pred_region
          %198 = dma.done %s190, 7040
        $region36: #{tpu_custom_call.1} parent=27 // pred_fallthru
          _
        %s199 = sand.u32 %s42, 1
        %s200 = scalar_lea.sflag [#allocation3], %s199
        %s201 = sand.u32 %s42, 1
        %s202 = smul.addr %s201, 1152
        %s203 = scalar_lea.vmem [#allocation2], %s202
        %p204 = pneg %p55
        %p205 = pneg %p52
        %s206 = sand.u32 %s68, 1
        %s207 = scalar_lea.sflag [#allocation6], %s206
        %s208 = sand.u32 %s68, 1
        %s209 = smul.addr %s208, 440
        %s210 = scalar_lea.vmem [#allocation5], %s209
        %p211 = pneg %p81
        %p212 = pneg %p78
        %p213 = pneg %p109
        %p214 = pneg %p106
        %s215 = sand.u32 %s96, 1
        %s216 = scalar_lea.sflag [#allocation4], %s215
        %s217 = sand.u32 %s96, 1
        %s218 = smul.addr %s217, 128
        %s219 = scalar_lea.vmem [#allocation7], %s218
        %s220 = smul.u32 16, %s27
        %s221 = smul.u32 %s27, 128
        %s222 = scalar_lea.vmem %s193, %s221 [#allocation5]
        %v223 = vld [vmem:[%s222] sm:$0xff]
        %v224 = vld [vmem:[%s222 + $0x8] sm:$0xff]
        %v225 = vld [vmem:[%s222 + $0x10] sm:$0xff]
        %v226 = vld [vmem:[%s222 + $0x18] sm:$0xff]
        %v227 = vld [vmem:[%s222 + $0x20] sm:$0xff]
        %v228 = vld [vmem:[%s222 + $0x28] sm:$0xff]
        %v229 = vld [vmem:[%s222 + $0x30] sm:$0xff]
        %v230 = vld [vmem:[%s222 + $0x38] sm:$0xff]
        %v231 = vld [vmem:[%s222 + $0x40] sm:$0xff]
        %v232 = vld [vmem:[%s222 + $0x48] sm:$0xff]
        %v233 = vld [vmem:[%s222 + $0x50] sm:$0xff]
        %v234 = vld [vmem:[%s222 + $0x58] sm:$0xff]
        %v235 = vld [vmem:[%s222 + $0x60] sm:$0xff]
        %v236 = vld [vmem:[%s222 + $0x68] sm:$0xff]
        %v237 = vld [vmem:[%s222 + $0x70] sm:$0xff]
        %v238 = vld [vmem:[%s222 + $0x78] sm:$0xff]
        %v239 = vld [vmem:[%s183] sm:$0xff]
        %v240 = vld [vmem:[%s183 + $0x8] sm:$0xff]
        %v241 = vld [vmem:[%s183 + $0x10] sm:$0xff]
        %v242 = vld [vmem:[%s183 + $0x18] sm:$0xff]
        %v243 = vld [vmem:[%s183 + $0x20] sm:$0xff]
        %v244 = vld [vmem:[%s183 + $0x28] sm:$0xff]
        %v245 = vld [vmem:[%s183 + $0x30] sm:$0xff]
        %v246 = vld [vmem:[%s183 + $0x38] sm:$0xff]
        %v247 = vld [vmem:[%s183 + $0x40] sm:$0xff]
        %v248 = vld [vmem:[%s183 + $0x48] sm:$0xff]
        %v249 = vld [vmem:[%s183 + $0x50] sm:$0xff]
        %v250 = vld [vmem:[%s183 + $0x58] sm:$0xff]
        %v251 = vld [vmem:[%s183 + $0x60] sm:$0xff]
        %v252 = vld [vmem:[%s183 + $0x68] sm:$0xff]
        %v253 = vld [vmem:[%s183 + $0x70] sm:$0xff]
        %v254 = vld [vmem:[%s183 + $0x78] sm:$0xff]
        %s255 = sadd.s32 %s221, 1
        %s256 = scalar_lea.vmem %s193, %s255 [#allocation5]
        %v257 = vld [vmem:[%s256] sm:$0xff]
        %v258 = vld [vmem:[%s256 + $0x8] sm:$0xff]
        %v259 = vld [vmem:[%s256 + $0x10] sm:$0xff]
        %v260 = vld [vmem:[%s256 + $0x18] sm:$0xff]
        %v261 = vld [vmem:[%s256 + $0x20] sm:$0xff]
        %v262 = vld [vmem:[%s256 + $0x28] sm:$0xff]
        %v263 = vld [vmem:[%s256 + $0x30] sm:$0xff]
        %v264 = vld [vmem:[%s256 + $0x38] sm:$0xff]
        %v265 = vld [vmem:[%s256 + $0x40] sm:$0xff]
        %v266 = vld [vmem:[%s256 + $0x48] sm:$0xff]
        %v267 = vld [vmem:[%s256 + $0x50] sm:$0xff]
        %v268 = vld [vmem:[%s256 + $0x58] sm:$0xff]
        %v269 = vld [vmem:[%s256 + $0x60] sm:$0xff]
        %v270 = vld [vmem:[%s256 + $0x68] sm:$0xff]
        %v271 = vld [vmem:[%s256 + $0x70] sm:$0xff]
        %v272 = vld [vmem:[%s256 + $0x78] sm:$0xff]
        %s273 = scalar_lea.vmem %s183, 128 [#allocation2]
        %v274 = vld [vmem:[%s273] sm:$0xff]
        %v275 = vld [vmem:[%s273 + $0x8] sm:$0xff]
        %v276 = vld [vmem:[%s273 + $0x10] sm:$0xff]
        %v277 = vld [vmem:[%s273 + $0x18] sm:$0xff]
        %v278 = vld [vmem:[%s273 + $0x20] sm:$0xff]
        %v279 = vld [vmem:[%s273 + $0x28] sm:$0xff]
        %v280 = vld [vmem:[%s273 + $0x30] sm:$0xff]
        %v281 = vld [vmem:[%s273 + $0x38] sm:$0xff]
        %v282 = vld [vmem:[%s273 + $0x40] sm:$0xff]
        %v283 = vld [vmem:[%s273 + $0x48] sm:$0xff]
        %v284 = vld [vmem:[%s273 + $0x50] sm:$0xff]
        %v285 = vld [vmem:[%s273 + $0x58] sm:$0xff]
        %v286 = vld [vmem:[%s273 + $0x60] sm:$0xff]
        %v287 = vld [vmem:[%s273 + $0x68] sm:$0xff]
        %v288 = vld [vmem:[%s273 + $0x70] sm:$0xff]
        %v289 = vld [vmem:[%s273 + $0x78] sm:$0xff]
        %290 = vmatpush.msra.mxu0 %v289
        %291 = vmatpush.msra.mxu0 %v288
        %292 = vmatpush.msra.mxu0 %v287
        %293 = vmatpush.msra.mxu0 %v286
        %294 = vmatpush.msra.mxu0 %v285
        %295 = vmatpush.msra.mxu0 %v284
        %296 = vmatpush.msra.mxu0 %v283
        %297 = vmatpush.msra.mxu0 %v282
        %298 = vmatpush.msra.mxu0 %v281
        %299 = vmatpush.msra.mxu0 %v280
        %300 = vmatpush.msra.mxu0 %v279
        %301 = vmatpush.msra.mxu0 %v278
        %302 = vmatpush.msra.mxu0 %v277
        %303 = vmatpush.msra.mxu0 %v276
        %304 = vmatpush.msra.mxu0 %v275
        %305 = vmatpush.msra.mxu0 %v274
        %306 = vmatmul.f32.gmra.mxu0 %v257
        %v307 = vpop.f32.mrf.mxu0
        %v308 = vadd.f32 0.0, %v307
        %309 = vmatmul.f32.gmra.mxu0 %v258
        %v310 = vpop.f32.mrf.mxu0
        %v311 = vadd.f32 0.0, %v310
        %312 = vmatmul.f32.gmra.mxu0 %v259
        %v313 = vpop.f32.mrf.mxu0
        %v314 = vadd.f32 0.0, %v313
        %315 = vmatmul.f32.gmra.mxu0 %v260
        %v316 = vpop.f32.mrf.mxu0
        %v317 = vadd.f32 0.0, %v316
        %318 = vmatmul.f32.gmra.mxu0 %v261
        %v319 = vpop.f32.mrf.mxu0
        %v320 = vadd.f32 0.0, %v319
        %321 = vmatmul.f32.gmra.mxu0 %v262
        %v322 = vpop.f32.mrf.mxu0
        %v323 = vadd.f32 0.0, %v322
        %324 = vmatmul.f32.gmra.mxu0 %v263
        %v325 = vpop.f32.mrf.mxu0
        %v326 = vadd.f32 0.0, %v325
        %327 = vmatmul.f32.gmra.mxu0 %v264
        %v328 = vpop.f32.mrf.mxu0
        %v329 = vadd.f32 0.0, %v328
        %330 = vmatmul.f32.gmra.mxu0 %v265
        %v331 = vpop.f32.mrf.mxu0
        %v332 = vadd.f32 0.0, %v331
        %333 = vmatmul.f32.gmra.mxu0 %v266
        %v334 = vpop.f32.mrf.mxu0
        %v335 = vadd.f32 0.0, %v334
        %336 = vmatmul.f32.gmra.mxu0 %v267
        %v337 = vpop.f32.mrf.mxu0
        %v338 = vadd.f32 0.0, %v337
        %339 = vmatmul.f32.gmra.mxu0 %v268
        %v340 = vpop.f32.mrf.mxu0
        %v341 = vadd.f32 0.0, %v340
        %342 = vmatmul.f32.gmra.mxu0 %v269
        %v343 = vpop.f32.mrf.mxu0
        %v344 = vadd.f32 0.0, %v343
        %345 = vmatmul.f32.gmra.mxu0 %v270
        %v346 = vpop.f32.mrf.mxu0
        %v347 = vadd.f32 0.0, %v346
        %348 = vmatmul.f32.gmra.mxu0 %v271
        %v349 = vpop.f32.mrf.mxu0
        %v350 = vadd.f32 0.0, %v349
        %351 = vmatmul.f32.gmra.mxu0 %v272
        %v352 = vpop.f32.mrf.mxu0
        %v353 = vadd.f32 0.0, %v352
        %354 = vdwg.mxu0
        %355 = vmatpush.msra.mxu0 %v254
        %356 = vmatpush.msra.mxu0 %v253
        %357 = vmatpush.msra.mxu0 %v252
        %358 = vmatpush.msra.mxu0 %v251
        %359 = vmatpush.msra.mxu0 %v250
        %360 = vmatpush.msra.mxu0 %v249
        %361 = vmatpush.msra.mxu0 %v248
        %362 = vmatpush.msra.mxu0 %v247
        %363 = vmatpush.msra.mxu0 %v246
        %364 = vmatpush.msra.mxu0 %v245
        %365 = vmatpush.msra.mxu0 %v244
        %366 = vmatpush.msra.mxu0 %v243
        %367 = vmatpush.msra.mxu0 %v242
        %368 = vmatpush.msra.mxu0 %v241
        %369 = vmatpush.msra.mxu0 %v240
        %370 = vmatpush.msra.mxu0 %v239
        %371 = vmatmul.f32.gmra.mxu0 %v223
        %v372 = vpop.f32.mrf.mxu0
        %v373 = vadd.f32 %v308, %v372
        %374 = vmatmul.f32.gmra.mxu0 %v224
        %v375 = vpop.f32.mrf.mxu0
        %v376 = vadd.f32 %v311, %v375
        %377 = vmatmul.f32.gmra.mxu0 %v225
        %v378 = vpop.f32.mrf.mxu0
        %v379 = vadd.f32 %v314, %v378
        %380 = vmatmul.f32.gmra.mxu0 %v226
        %v381 = vpop.f32.mrf.mxu0
        %v382 = vadd.f32 %v317, %v381
        %383 = vmatmul.f32.gmra.mxu0 %v227
        %v384 = vpop.f32.mrf.mxu0
        %v385 = vadd.f32 %v320, %v384
        %386 = vmatmul.f32.gmra.mxu0 %v228
        %v387 = vpop.f32.mrf.mxu0
        %v388 = vadd.f32 %v323, %v387
        %389 = vmatmul.f32.gmra.mxu0 %v229
        %v390 = vpop.f32.mrf.mxu0
        %v391 = vadd.f32 %v326, %v390
        %392 = vmatmul.f32.gmra.mxu0 %v230
        %v393 = vpop.f32.mrf.mxu0
        %v394 = vadd.f32 %v329, %v393
        %395 = vmatmul.f32.gmra.mxu0 %v231
        %v396 = vpop.f32.mrf.mxu0
        %v397 = vadd.f32 %v332, %v396
        %398 = vmatmul.f32.gmra.mxu0 %v232
        %v399 = vpop.f32.mrf.mxu0
        %v400 = vadd.f32 %v335, %v399
        %401 = vmatmul.f32.gmra.mxu0 %v233
        %v402 = vpop.f32.mrf.mxu0
        %v403 = vadd.f32 %v338, %v402
        %404 = vmatmul.f32.gmra.mxu0 %v234
        %v405 = vpop.f32.mrf.mxu0
        %v406 = vadd.f32 %v341, %v405
        %407 = vmatmul.f32.gmra.mxu0 %v235
        %v408 = vpop.f32.mrf.mxu0
        %v409 = vadd.f32 %v344, %v408
        %410 = vmatmul.f32.gmra.mxu0 %v236
        %v411 = vpop.f32.mrf.mxu0
        %v412 = vadd.f32 %v347, %v411
        %413 = vmatmul.f32.gmra.mxu0 %v237
        %v414 = vpop.f32.mrf.mxu0
        %v415 = vadd.f32 %v350, %v414
        %416 = vmatmul.f32.gmra.mxu0 %v238
        %v417 = vpop.f32.mrf.mxu0
        %v418 = vadd.f32 %v353, %v417
        %419 = vdwg.mxu0
        %s420 = sadd.s32 %s221, 2
        %s421 = scalar_lea.vmem %s193, %s420 [#allocation5]
        %v422 = vld [vmem:[%s421] sm:$0xff]
        %v423 = vld [vmem:[%s421 + $0x8] sm:$0xff]
        %v424 = vld [vmem:[%s421 + $0x10] sm:$0xff]
        %v425 = vld [vmem:[%s421 + $0x18] sm:$0xff]
        %v426 = vld [vmem:[%s421 + $0x20] sm:$0xff]
        %v427 = vld [vmem:[%s421 + $0x28] sm:$0xff]
        %v428 = vld [vmem:[%s421 + $0x30] sm:$0xff]
        %v429 = vld [vmem:[%s421 + $0x38] sm:$0xff]
        %v430 = vld [vmem:[%s421 + $0x40] sm:$0xff]
        %v431 = vld [vmem:[%s421 + $0x48] sm:$0xff]
        %v432 = vld [vmem:[%s421 + $0x50] sm:$0xff]
        %v433 = vld [vmem:[%s421 + $0x58] sm:$0xff]
        %v434 = vld [vmem:[%s421 + $0x60] sm:$0xff]
        %v435 = vld [vmem:[%s421 + $0x68] sm:$0xff]
        %v436 = vld [vmem:[%s421 + $0x70] sm:$0xff]
        %v437 = vld [vmem:[%s421 + $0x78] sm:$0xff]
        %s438 = scalar_lea.vmem %s183, 256 [#allocation2]
        %v439 = vld [vmem:[%s438] sm:$0xff]
        %v440 = vld [vmem:[%s438 + $0x8] sm:$0xff]
        %v441 = vld [vmem:[%s438 + $0x10] sm:$0xff]
        %v442 = vld [vmem:[%s438 + $0x18] sm:$0xff]
        %v443 = vld [vmem:[%s438 + $0x20] sm:$0xff]
        %v444 = vld [vmem:[%s438 + $0x28] sm:$0xff]
        %v445 = vld [vmem:[%s438 + $0x30] sm:$0xff]
        %v446 = vld [vmem:[%s438 + $0x38] sm:$0xff]
        %v447 = vld [vmem:[%s438 + $0x40] sm:$0xff]
        %v448 = vld [vmem:[%s438 + $0x48] sm:$0xff]
        %v449 = vld [vmem:[%s438 + $0x50] sm:$0xff]
        %v450 = vld [vmem:[%s438 + $0x58] sm:$0xff]
        %v451 = vld [vmem:[%s438 + $0x60] sm:$0xff]
        %v452 = vld [vmem:[%s438 + $0x68] sm:$0xff]
        %v453 = vld [vmem:[%s438 + $0x70] sm:$0xff]
        %v454 = vld [vmem:[%s438 + $0x78] sm:$0xff]
        %455 = vmatpush.msra.mxu0 %v454
        %456 = vmatpush.msra.mxu0 %v453
        %457 = vmatpush.msra.mxu0 %v452
        %458 = vmatpush.msra.mxu0 %v451
        %459 = vmatpush.msra.mxu0 %v450
        %460 = vmatpush.msra.mxu0 %v449
        %461 = vmatpush.msra.mxu0 %v448
        %462 = vmatpush.msra.mxu0 %v447
        %463 = vmatpush.msra.mxu0 %v446
        %464 = vmatpush.msra.mxu0 %v445
        %465 = vmatpush.msra.mxu0 %v444
        %466 = vmatpush.msra.mxu0 %v443
        %467 = vmatpush.msra.mxu0 %v442
        %468 = vmatpush.msra.mxu0 %v441
        %469 = vmatpush.msra.mxu0 %v440
        %470 = vmatpush.msra.mxu0 %v439
        %471 = vmatmul.f32.gmra.mxu0 %v422
        %v472 = vpop.f32.mrf.mxu0
        %v473 = vadd.f32 0.0, %v472
        %474 = vmatmul.f32.gmra.mxu0 %v423
        %v475 = vpop.f32.mrf.mxu0
        %v476 = vadd.f32 0.0, %v475
        %477 = vmatmul.f32.gmra.mxu0 %v424
        %v478 = vpop.f32.mrf.mxu0
        %v479 = vadd.f32 0.0, %v478
        %480 = vmatmul.f32.gmra.mxu0 %v425
        %v481 = vpop.f32.mrf.mxu0
        %v482 = vadd.f32 0.0, %v481
        %483 = vmatmul.f32.gmra.mxu0 %v426
        %v484 = vpop.f32.mrf.mxu0
        %v485 = vadd.f32 0.0, %v484
        %486 = vmatmul.f32.gmra.mxu0 %v427
        %v487 = vpop.f32.mrf.mxu0
        %v488 = vadd.f32 0.0, %v487
        %489 = vmatmul.f32.gmra.mxu0 %v428
        %v490 = vpop.f32.mrf.mxu0
        %v491 = vadd.f32 0.0, %v490
        %492 = vmatmul.f32.gmra.mxu0 %v429
        %v493 = vpop.f32.mrf.mxu0
        %v494 = vadd.f32 0.0, %v493
        %495 = vmatmul.f32.gmra.mxu0 %v430
        %v496 = vpop.f32.mrf.mxu0
        %v497 = vadd.f32 0.0, %v496
        %498 = vmatmul.f32.gmra.mxu0 %v431
        %v499 = vpop.f32.mrf.mxu0
        %v500 = vadd.f32 0.0, %v499
        %501 = vmatmul.f32.gmra.mxu0 %v432
        %v502 = vpop.f32.mrf.mxu0
        %v503 = vadd.f32 0.0, %v502
        %504 = vmatmul.f32.gmra.mxu0 %v433
        %v505 = vpop.f32.mrf.mxu0
        %v506 = vadd.f32 0.0, %v505
        %507 = vmatmul.f32.gmra.mxu0 %v434
        %v508 = vpop.f32.mrf.mxu0
        %v509 = vadd.f32 0.0, %v508
        %510 = vmatmul.f32.gmra.mxu0 %v435
        %v511 = vpop.f32.mrf.mxu0
        %v512 = vadd.f32 0.0, %v511
        %513 = vmatmul.f32.gmra.mxu0 %v436
        %v514 = vpop.f32.mrf.mxu0
        %v515 = vadd.f32 0.0, %v514
        %516 = vmatmul.f32.gmra.mxu0 %v437
        %v517 = vpop.f32.mrf.mxu0
        %v518 = vadd.f32 0.0, %v517
        %519 = vdwg.mxu0
        %v520 = vadd.f32 %v373, %v473
        %v521 = vadd.f32 %v376, %v476
        %v522 = vadd.f32 %v379, %v479
        %v523 = vadd.f32 %v382, %v482
        %v524 = vadd.f32 %v385, %v485
        %v525 = vadd.f32 %v388, %v488
        %v526 = vadd.f32 %v391, %v491
        %v527 = vadd.f32 %v394, %v494
        %v528 = vadd.f32 %v397, %v497
        %v529 = vadd.f32 %v400, %v500
        %v530 = vadd.f32 %v403, %v503
        %v531 = vadd.f32 %v406, %v506
        %v532 = vadd.f32 %v409, %v509
        %v533 = vadd.f32 %v412, %v512
        %v534 = vadd.f32 %v415, %v515
        %v535 = vadd.f32 %v418, %v518
        %s536 = sadd.s32 %s221, 24
        %s537 = scalar_lea.vmem %s193, %s536 [#allocation5]
        %v538 = vld [vmem:[%s537] sm:$0xff]
        %v539 = vld [vmem:[%s537 + $0x8] sm:$0xff]
        %v540 = vld [vmem:[%s537 + $0x10] sm:$0xff]
        %v541 = vld [vmem:[%s537 + $0x18] sm:$0xff]
        %v542 = vld [vmem:[%s537 + $0x20] sm:$0xff]
        %v543 = vld [vmem:[%s537 + $0x28] sm:$0xff]
        %v544 = vld [vmem:[%s537 + $0x30] sm:$0xff]
        %v545 = vld [vmem:[%s537 + $0x38] sm:$0xff]
        %v546 = vld [vmem:[%s537 + $0x40] sm:$0xff]
        %v547 = vld [vmem:[%s537 + $0x48] sm:$0xff]
        %v548 = vld [vmem:[%s537 + $0x50] sm:$0xff]
        %v549 = vld [vmem:[%s537 + $0x58] sm:$0xff]
        %v550 = vld [vmem:[%s537 + $0x60] sm:$0xff]
        %v551 = vld [vmem:[%s537 + $0x68] sm:$0xff]
        %v552 = vld [vmem:[%s537 + $0x70] sm:$0xff]
        %v553 = vld [vmem:[%s537 + $0x78] sm:$0xff]
        %s554 = scalar_lea.vmem %s183, 384 [#allocation2]
        %v555 = vld [vmem:[%s554] sm:$0xff]
        %v556 = vld [vmem:[%s554 + $0x8] sm:$0xff]
        %v557 = vld [vmem:[%s554 + $0x10] sm:$0xff]
        %v558 = vld [vmem:[%s554 + $0x18] sm:$0xff]
        %v559 = vld [vmem:[%s554 + $0x20] sm:$0xff]
        %v560 = vld [vmem:[%s554 + $0x28] sm:$0xff]
        %v561 = vld [vmem:[%s554 + $0x30] sm:$0xff]
        %v562 = vld [vmem:[%s554 + $0x38] sm:$0xff]
        %v563 = vld [vmem:[%s554 + $0x40] sm:$0xff]
        %v564 = vld [vmem:[%s554 + $0x48] sm:$0xff]
        %v565 = vld [vmem:[%s554 + $0x50] sm:$0xff]
        %v566 = vld [vmem:[%s554 + $0x58] sm:$0xff]
        %v567 = vld [vmem:[%s554 + $0x60] sm:$0xff]
        %v568 = vld [vmem:[%s554 + $0x68] sm:$0xff]
        %v569 = vld [vmem:[%s554 + $0x70] sm:$0xff]
        %v570 = vld [vmem:[%s554 + $0x78] sm:$0xff]
        %571 = vmatpush.msra.mxu0 %v570
        %572 = vmatpush.msra.mxu0 %v569
        %573 = vmatpush.msra.mxu0 %v568
        %574 = vmatpush.msra.mxu0 %v567
        %575 = vmatpush.msra.mxu0 %v566
        %576 = vmatpush.msra.mxu0 %v565
        %577 = vmatpush.msra.mxu0 %v564
        %578 = vmatpush.msra.mxu0 %v563
        %579 = vmatpush.msra.mxu0 %v562
        %580 = vmatpush.msra.mxu0 %v561
        %581 = vmatpush.msra.mxu0 %v560
        %582 = vmatpush.msra.mxu0 %v559
        %583 = vmatpush.msra.mxu0 %v558
        %584 = vmatpush.msra.mxu0 %v557
        %585 = vmatpush.msra.mxu0 %v556
        %586 = vmatpush.msra.mxu0 %v555
        %587 = vmatmul.f32.gmra.mxu0 %v538
        %v588 = vpop.f32.mrf.mxu0
        %v589 = vadd.f32 0.0, %v588
        %590 = vmatmul.f32.gmra.mxu0 %v539
        %v591 = vpop.f32.mrf.mxu0
        %v592 = vadd.f32 0.0, %v591
        %593 = vmatmul.f32.gmra.mxu0 %v540
        %v594 = vpop.f32.mrf.mxu0
        %v595 = vadd.f32 0.0, %v594
        %596 = vmatmul.f32.gmra.mxu0 %v541
        %v597 = vpop.f32.mrf.mxu0
        %v598 = vadd.f32 0.0, %v597
        %599 = vmatmul.f32.gmra.mxu0 %v542
        %v600 = vpop.f32.mrf.mxu0
        %v601 = vadd.f32 0.0, %v600
        %602 = vmatmul.f32.gmra.mxu0 %v543
        %v603 = vpop.f32.mrf.mxu0
        %v604 = vadd.f32 0.0, %v603
        %605 = vmatmul.f32.gmra.mxu0 %v544
        %v606 = vpop.f32.mrf.mxu0
        %v607 = vadd.f32 0.0, %v606
        %608 = vmatmul.f32.gmra.mxu0 %v545
        %v609 = vpop.f32.mrf.mxu0
        %v610 = vadd.f32 0.0, %v609
        %611 = vmatmul.f32.gmra.mxu0 %v546
        %v612 = vpop.f32.mrf.mxu0
        %v613 = vadd.f32 0.0, %v612
        %614 = vmatmul.f32.gmra.mxu0 %v547
        %v615 = vpop.f32.mrf.mxu0
        %v616 = vadd.f32 0.0, %v615
        %617 = vmatmul.f32.gmra.mxu0 %v548
        %v618 = vpop.f32.mrf.mxu0
        %v619 = vadd.f32 0.0, %v618
        %620 = vmatmul.f32.gmra.mxu0 %v549
        %v621 = vpop.f32.mrf.mxu0
        %v622 = vadd.f32 0.0, %v621
        %623 = vmatmul.f32.gmra.mxu0 %v550
        %v624 = vpop.f32.mrf.mxu0
        %v625 = vadd.f32 0.0, %v624
        %626 = vmatmul.f32.gmra.mxu0 %v551
        %v627 = vpop.f32.mrf.mxu0
        %v628 = vadd.f32 0.0, %v627
        %629 = vmatmul.f32.gmra.mxu0 %v552
        %v630 = vpop.f32.mrf.mxu0
        %v631 = vadd.f32 0.0, %v630
        %632 = vmatmul.f32.gmra.mxu0 %v553
        %v633 = vpop.f32.mrf.mxu0
        %v634 = vadd.f32 0.0, %v633
        %635 = vdwg.mxu0
        %v636 = vadd.f32 %v520, %v589
        %v637 = vadd.f32 %v521, %v592
        %v638 = vadd.f32 %v522, %v595
        %v639 = vadd.f32 %v523, %v598
        %v640 = vadd.f32 %v524, %v601
        %v641 = vadd.f32 %v525, %v604
        %v642 = vadd.f32 %v526, %v607
        %v643 = vadd.f32 %v527, %v610
        %v644 = vadd.f32 %v528, %v613
        %v645 = vadd.f32 %v529, %v616
        %v646 = vadd.f32 %v530, %v619
        %v647 = vadd.f32 %v531, %v622
        %v648 = vadd.f32 %v532, %v625
        %v649 = vadd.f32 %v533, %v628
        %v650 = vadd.f32 %v534, %v631
        %v651 = vadd.f32 %v535, %v634
        %s652 = sadd.s32 %s221, 25
        %s653 = scalar_lea.vmem %s193, %s652 [#allocation5]
        %v654 = vld [vmem:[%s653] sm:$0xff]
        %v655 = vld [vmem:[%s653 + $0x8] sm:$0xff]
        %v656 = vld [vmem:[%s653 + $0x10] sm:$0xff]
        %v657 = vld [vmem:[%s653 + $0x18] sm:$0xff]
        %v658 = vld [vmem:[%s653 + $0x20] sm:$0xff]
        %v659 = vld [vmem:[%s653 + $0x28] sm:$0xff]
        %v660 = vld [vmem:[%s653 + $0x30] sm:$0xff]
        %v661 = vld [vmem:[%s653 + $0x38] sm:$0xff]
        %v662 = vld [vmem:[%s653 + $0x40] sm:$0xff]
        %v663 = vld [vmem:[%s653 + $0x48] sm:$0xff]
        %v664 = vld [vmem:[%s653 + $0x50] sm:$0xff]
        %v665 = vld [vmem:[%s653 + $0x58] sm:$0xff]
        %v666 = vld [vmem:[%s653 + $0x60] sm:$0xff]
        %v667 = vld [vmem:[%s653 + $0x68] sm:$0xff]
        %v668 = vld [vmem:[%s653 + $0x70] sm:$0xff]
        %v669 = vld [vmem:[%s653 + $0x78] sm:$0xff]
        %s670 = scalar_lea.vmem %s183, 512 [#allocation2]
        %v671 = vld [vmem:[%s670] sm:$0xff]
        %v672 = vld [vmem:[%s670 + $0x8] sm:$0xff]
        %v673 = vld [vmem:[%s670 + $0x10] sm:$0xff]
        %v674 = vld [vmem:[%s670 + $0x18] sm:$0xff]
        %v675 = vld [vmem:[%s670 + $0x20] sm:$0xff]
        %v676 = vld [vmem:[%s670 + $0x28] sm:$0xff]
        %v677 = vld [vmem:[%s670 + $0x30] sm:$0xff]
        %v678 = vld [vmem:[%s670 + $0x38] sm:$0xff]
        %v679 = vld [vmem:[%s670 + $0x40] sm:$0xff]
        %v680 = vld [vmem:[%s670 + $0x48] sm:$0xff]
        %v681 = vld [vmem:[%s670 + $0x50] sm:$0xff]
        %v682 = vld [vmem:[%s670 + $0x58] sm:$0xff]
        %v683 = vld [vmem:[%s670 + $0x60] sm:$0xff]
        %v684 = vld [vmem:[%s670 + $0x68] sm:$0xff]
        %v685 = vld [vmem:[%s670 + $0x70] sm:$0xff]
        %v686 = vld [vmem:[%s670 + $0x78] sm:$0xff]
        %687 = vmatpush.msra.mxu0 %v686
        %688 = vmatpush.msra.mxu0 %v685
        %689 = vmatpush.msra.mxu0 %v684
        %690 = vmatpush.msra.mxu0 %v683
        %691 = vmatpush.msra.mxu0 %v682
        %692 = vmatpush.msra.mxu0 %v681
        %693 = vmatpush.msra.mxu0 %v680
        %694 = vmatpush.msra.mxu0 %v679
        %695 = vmatpush.msra.mxu0 %v678
        %696 = vmatpush.msra.mxu0 %v677
        %697 = vmatpush.msra.mxu0 %v676
        %698 = vmatpush.msra.mxu0 %v675
        %699 = vmatpush.msra.mxu0 %v674
        %700 = vmatpush.msra.mxu0 %v673
        %701 = vmatpush.msra.mxu0 %v672
        %702 = vmatpush.msra.mxu0 %v671
        %703 = vmatmul.f32.gmra.mxu0 %v654
        %v704 = vpop.f32.mrf.mxu0
        %v705 = vadd.f32 0.0, %v704
        %706 = vmatmul.f32.gmra.mxu0 %v655
        %v707 = vpop.f32.mrf.mxu0
        %v708 = vadd.f32 0.0, %v707
        %709 = vmatmul.f32.gmra.mxu0 %v656
        %v710 = vpop.f32.mrf.mxu0
        %v711 = vadd.f32 0.0, %v710
        %712 = vmatmul.f32.gmra.mxu0 %v657
        %v713 = vpop.f32.mrf.mxu0
        %v714 = vadd.f32 0.0, %v713
        %715 = vmatmul.f32.gmra.mxu0 %v658
        %v716 = vpop.f32.mrf.mxu0
        %v717 = vadd.f32 0.0, %v716
        %718 = vmatmul.f32.gmra.mxu0 %v659
        %v719 = vpop.f32.mrf.mxu0
        %v720 = vadd.f32 0.0, %v719
        %721 = vmatmul.f32.gmra.mxu0 %v660
        %v722 = vpop.f32.mrf.mxu0
        %v723 = vadd.f32 0.0, %v722
        %724 = vmatmul.f32.gmra.mxu0 %v661
        %v725 = vpop.f32.mrf.mxu0
        %v726 = vadd.f32 0.0, %v725
        %727 = vmatmul.f32.gmra.mxu0 %v662
        %v728 = vpop.f32.mrf.mxu0
        %v729 = vadd.f32 0.0, %v728
        %730 = vmatmul.f32.gmra.mxu0 %v663
        %v731 = vpop.f32.mrf.mxu0
        %v732 = vadd.f32 0.0, %v731
        %733 = vmatmul.f32.gmra.mxu0 %v664
        %v734 = vpop.f32.mrf.mxu0
        %v735 = vadd.f32 0.0, %v734
        %736 = vmatmul.f32.gmra.mxu0 %v665
        %v737 = vpop.f32.mrf.mxu0
        %v738 = vadd.f32 0.0, %v737
        %739 = vmatmul.f32.gmra.mxu0 %v666
        %v740 = vpop.f32.mrf.mxu0
        %v741 = vadd.f32 0.0, %v740
        %742 = vmatmul.f32.gmra.mxu0 %v667
        %v743 = vpop.f32.mrf.mxu0
        %v744 = vadd.f32 0.0, %v743
        %745 = vmatmul.f32.gmra.mxu0 %v668
        %v746 = vpop.f32.mrf.mxu0
        %v747 = vadd.f32 0.0, %v746
        %748 = vmatmul.f32.gmra.mxu0 %v669
        %v749 = vpop.f32.mrf.mxu0
        %v750 = vadd.f32 0.0, %v749
        %751 = vdwg.mxu0
        %v752 = vadd.f32 %v636, %v705
        %v753 = vadd.f32 %v637, %v708
        %v754 = vadd.f32 %v638, %v711
        %v755 = vadd.f32 %v639, %v714
        %v756 = vadd.f32 %v640, %v717
        %v757 = vadd.f32 %v641, %v720
        %v758 = vadd.f32 %v642, %v723
        %v759 = vadd.f32 %v643, %v726
        %v760 = vadd.f32 %v644, %v729
        %v761 = vadd.f32 %v645, %v732
        %v762 = vadd.f32 %v646, %v735
        %v763 = vadd.f32 %v647, %v738
        %v764 = vadd.f32 %v648, %v741
        %v765 = vadd.f32 %v649, %v744
        %v766 = vadd.f32 %v650, %v747
        %v767 = vadd.f32 %v651, %v750
        %s768 = sadd.s32 %s221, 26
        %s769 = scalar_lea.vmem %s193, %s768 [#allocation5]
        %v770 = vld [vmem:[%s769] sm:$0xff]
        %v771 = vld [vmem:[%s769 + $0x8] sm:$0xff]
        %v772 = vld [vmem:[%s769 + $0x10] sm:$0xff]
        %v773 = vld [vmem:[%s769 + $0x18] sm:$0xff]
        %v774 = vld [vmem:[%s769 + $0x20] sm:$0xff]
        %v775 = vld [vmem:[%s769 + $0x28] sm:$0xff]
        %v776 = vld [vmem:[%s769 + $0x30] sm:$0xff]
        %v777 = vld [vmem:[%s769 + $0x38] sm:$0xff]
        %v778 = vld [vmem:[%s769 + $0x40] sm:$0xff]
        %v779 = vld [vmem:[%s769 + $0x48] sm:$0xff]
        %v780 = vld [vmem:[%s769 + $0x50] sm:$0xff]
        %v781 = vld [vmem:[%s769 + $0x58] sm:$0xff]
        %v782 = vld [vmem:[%s769 + $0x60] sm:$0xff]
        %v783 = vld [vmem:[%s769 + $0x68] sm:$0xff]
        %v784 = vld [vmem:[%s769 + $0x70] sm:$0xff]
        %v785 = vld [vmem:[%s769 + $0x78] sm:$0xff]
        %s786 = scalar_lea.vmem %s183, 640 [#allocation2]
        %v787 = vld [vmem:[%s786] sm:$0xff]
        %v788 = vld [vmem:[%s786 + $0x8] sm:$0xff]
        %v789 = vld [vmem:[%s786 + $0x10] sm:$0xff]
        %v790 = vld [vmem:[%s786 + $0x18] sm:$0xff]
        %v791 = vld [vmem:[%s786 + $0x20] sm:$0xff]
        %v792 = vld [vmem:[%s786 + $0x28] sm:$0xff]
        %v793 = vld [vmem:[%s786 + $0x30] sm:$0xff]
        %v794 = vld [vmem:[%s786 + $0x38] sm:$0xff]
        %v795 = vld [vmem:[%s786 + $0x40] sm:$0xff]
        %v796 = vld [vmem:[%s786 + $0x48] sm:$0xff]
        %v797 = vld [vmem:[%s786 + $0x50] sm:$0xff]
        %v798 = vld [vmem:[%s786 + $0x58] sm:$0xff]
        %v799 = vld [vmem:[%s786 + $0x60] sm:$0xff]
        %v800 = vld [vmem:[%s786 + $0x68] sm:$0xff]
        %v801 = vld [vmem:[%s786 + $0x70] sm:$0xff]
        %v802 = vld [vmem:[%s786 + $0x78] sm:$0xff]
        %803 = vmatpush.msra.mxu0 %v802
        %804 = vmatpush.msra.mxu0 %v801
        %805 = vmatpush.msra.mxu0 %v800
        %806 = vmatpush.msra.mxu0 %v799
        %807 = vmatpush.msra.mxu0 %v798
        %808 = vmatpush.msra.mxu0 %v797
        %809 = vmatpush.msra.mxu0 %v796
        %810 = vmatpush.msra.mxu0 %v795
        %811 = vmatpush.msra.mxu0 %v794
        %812 = vmatpush.msra.mxu0 %v793
        %813 = vmatpush.msra.mxu0 %v792
        %814 = vmatpush.msra.mxu0 %v791
        %815 = vmatpush.msra.mxu0 %v790
        %816 = vmatpush.msra.mxu0 %v789
        %817 = vmatpush.msra.mxu0 %v788
        %818 = vmatpush.msra.mxu0 %v787
        %819 = vmatmul.f32.gmra.mxu0 %v770
        %v820 = vpop.f32.mrf.mxu0
        %v821 = vadd.f32 0.0, %v820
        %822 = vmatmul.f32.gmra.mxu0 %v771
        %v823 = vpop.f32.mrf.mxu0
        %v824 = vadd.f32 0.0, %v823
        %825 = vmatmul.f32.gmra.mxu0 %v772
        %v826 = vpop.f32.mrf.mxu0
        %v827 = vadd.f32 0.0, %v826
        %828 = vmatmul.f32.gmra.mxu0 %v773
        %v829 = vpop.f32.mrf.mxu0
        %v830 = vadd.f32 0.0, %v829
        %831 = vmatmul.f32.gmra.mxu0 %v774
        %v832 = vpop.f32.mrf.mxu0
        %v833 = vadd.f32 0.0, %v832
        %834 = vmatmul.f32.gmra.mxu0 %v775
        %v835 = vpop.f32.mrf.mxu0
        %v836 = vadd.f32 0.0, %v835
        %837 = vmatmul.f32.gmra.mxu0 %v776
        %v838 = vpop.f32.mrf.mxu0
        %v839 = vadd.f32 0.0, %v838
        %840 = vmatmul.f32.gmra.mxu0 %v777
        %v841 = vpop.f32.mrf.mxu0
        %v842 = vadd.f32 0.0, %v841
        %843 = vmatmul.f32.gmra.mxu0 %v778
        %v844 = vpop.f32.mrf.mxu0
        %v845 = vadd.f32 0.0, %v844
        %846 = vmatmul.f32.gmra.mxu0 %v779
        %v847 = vpop.f32.mrf.mxu0
        %v848 = vadd.f32 0.0, %v847
        %849 = vmatmul.f32.gmra.mxu0 %v780
        %v850 = vpop.f32.mrf.mxu0
        %v851 = vadd.f32 0.0, %v850
        %852 = vmatmul.f32.gmra.mxu0 %v781
        %v853 = vpop.f32.mrf.mxu0
        %v854 = vadd.f32 0.0, %v853
        %855 = vmatmul.f32.gmra.mxu0 %v782
        %v856 = vpop.f32.mrf.mxu0
        %v857 = vadd.f32 0.0, %v856
        %858 = vmatmul.f32.gmra.mxu0 %v783
        %v859 = vpop.f32.mrf.mxu0
        %v860 = vadd.f32 0.0, %v859
        %861 = vmatmul.f32.gmra.mxu0 %v784
        %v862 = vpop.f32.mrf.mxu0
        %v863 = vadd.f32 0.0, %v862
        %864 = vmatmul.f32.gmra.mxu0 %v785
        %v865 = vpop.f32.mrf.mxu0
        %v866 = vadd.f32 0.0, %v865
        %867 = vdwg.mxu0
        %v868 = vadd.f32 %v752, %v821
        %v869 = vadd.f32 %v753, %v824
        %v870 = vadd.f32 %v754, %v827
        %v871 = vadd.f32 %v755, %v830
        %v872 = vadd.f32 %v756, %v833
        %v873 = vadd.f32 %v757, %v836
        %v874 = vadd.f32 %v758, %v839
        %v875 = vadd.f32 %v759, %v842
        %v876 = vadd.f32 %v760, %v845
        %v877 = vadd.f32 %v761, %v848
        %v878 = vadd.f32 %v762, %v851
        %v879 = vadd.f32 %v763, %v854
        %v880 = vadd.f32 %v764, %v857
        %v881 = vadd.f32 %v765, %v860
        %v882 = vadd.f32 %v766, %v863
        %v883 = vadd.f32 %v767, %v866
        %s884 = sadd.s32 %s221, 48
        %s885 = scalar_lea.vmem %s193, %s884 [#allocation5]
        %v886 = vld [vmem:[%s885] sm:$0xff]
        %v887 = vld [vmem:[%s885 + $0x8] sm:$0xff]
        %v888 = vld [vmem:[%s885 + $0x10] sm:$0xff]
        %v889 = vld [vmem:[%s885 + $0x18] sm:$0xff]
        %v890 = vld [vmem:[%s885 + $0x20] sm:$0xff]
        %v891 = vld [vmem:[%s885 + $0x28] sm:$0xff]
        %v892 = vld [vmem:[%s885 + $0x30] sm:$0xff]
        %v893 = vld [vmem:[%s885 + $0x38] sm:$0xff]
        %v894 = vld [vmem:[%s885 + $0x40] sm:$0xff]
        %v895 = vld [vmem:[%s885 + $0x48] sm:$0xff]
        %v896 = vld [vmem:[%s885 + $0x50] sm:$0xff]
        %v897 = vld [vmem:[%s885 + $0x58] sm:$0xff]
        %v898 = vld [vmem:[%s885 + $0x60] sm:$0xff]
        %v899 = vld [vmem:[%s885 + $0x68] sm:$0xff]
        %v900 = vld [vmem:[%s885 + $0x70] sm:$0xff]
        %v901 = vld [vmem:[%s885 + $0x78] sm:$0xff]
        %s902 = scalar_lea.vmem %s183, 768 [#allocation2]
        %v903 = vld [vmem:[%s902] sm:$0xff]
        %v904 = vld [vmem:[%s902 + $0x8] sm:$0xff]
        %v905 = vld [vmem:[%s902 + $0x10] sm:$0xff]
        %v906 = vld [vmem:[%s902 + $0x18] sm:$0xff]
        %v907 = vld [vmem:[%s902 + $0x20] sm:$0xff]
        %v908 = vld [vmem:[%s902 + $0x28] sm:$0xff]
        %v909 = vld [vmem:[%s902 + $0x30] sm:$0xff]
        %v910 = vld [vmem:[%s902 + $0x38] sm:$0xff]
        %v911 = vld [vmem:[%s902 + $0x40] sm:$0xff]
        %v912 = vld [vmem:[%s902 + $0x48] sm:$0xff]
        %v913 = vld [vmem:[%s902 + $0x50] sm:$0xff]
        %v914 = vld [vmem:[%s902 + $0x58] sm:$0xff]
        %v915 = vld [vmem:[%s902 + $0x60] sm:$0xff]
        %v916 = vld [vmem:[%s902 + $0x68] sm:$0xff]
        %v917 = vld [vmem:[%s902 + $0x70] sm:$0xff]
        %v918 = vld [vmem:[%s902 + $0x78] sm:$0xff]
        %919 = vmatpush.msra.mxu0 %v918
        %920 = vmatpush.msra.mxu0 %v917
        %921 = vmatpush.msra.mxu0 %v916
        %922 = vmatpush.msra.mxu0 %v915
        %923 = vmatpush.msra.mxu0 %v914
        %924 = vmatpush.msra.mxu0 %v913
        %925 = vmatpush.msra.mxu0 %v912
        %926 = vmatpush.msra.mxu0 %v911
        %927 = vmatpush.msra.mxu0 %v910
        %928 = vmatpush.msra.mxu0 %v909
        %929 = vmatpush.msra.mxu0 %v908
        %930 = vmatpush.msra.mxu0 %v907
        %931 = vmatpush.msra.mxu0 %v906
        %932 = vmatpush.msra.mxu0 %v905
        %933 = vmatpush.msra.mxu0 %v904
        %934 = vmatpush.msra.mxu0 %v903
        %935 = vmatmul.f32.gmra.mxu0 %v886
        %v936 = vpop.f32.mrf.mxu0
        %v937 = vadd.f32 0.0, %v936
        %938 = vmatmul.f32.gmra.mxu0 %v887
        %v939 = vpop.f32.mrf.mxu0
        %v940 = vadd.f32 0.0, %v939
        %941 = vmatmul.f32.gmra.mxu0 %v888
        %v942 = vpop.f32.mrf.mxu0
        %v943 = vadd.f32 0.0, %v942
        %944 = vmatmul.f32.gmra.mxu0 %v889
        %v945 = vpop.f32.mrf.mxu0
        %v946 = vadd.f32 0.0, %v945
        %947 = vmatmul.f32.gmra.mxu0 %v890
        %v948 = vpop.f32.mrf.mxu0
        %v949 = vadd.f32 0.0, %v948
        %950 = vmatmul.f32.gmra.mxu0 %v891
        %v951 = vpop.f32.mrf.mxu0
        %v952 = vadd.f32 0.0, %v951
        %953 = vmatmul.f32.gmra.mxu0 %v892
        %v954 = vpop.f32.mrf.mxu0
        %v955 = vadd.f32 0.0, %v954
        %956 = vmatmul.f32.gmra.mxu0 %v893
        %v957 = vpop.f32.mrf.mxu0
        %v958 = vadd.f32 0.0, %v957
        %959 = vmatmul.f32.gmra.mxu0 %v894
        %v960 = vpop.f32.mrf.mxu0
        %v961 = vadd.f32 0.0, %v960
        %962 = vmatmul.f32.gmra.mxu0 %v895
        %v963 = vpop.f32.mrf.mxu0
        %v964 = vadd.f32 0.0, %v963
        %965 = vmatmul.f32.gmra.mxu0 %v896
        %v966 = vpop.f32.mrf.mxu0
        %v967 = vadd.f32 0.0, %v966
        %968 = vmatmul.f32.gmra.mxu0 %v897
        %v969 = vpop.f32.mrf.mxu0
        %v970 = vadd.f32 0.0, %v969
        %971 = vmatmul.f32.gmra.mxu0 %v898
        %v972 = vpop.f32.mrf.mxu0
        %v973 = vadd.f32 0.0, %v972
        %974 = vmatmul.f32.gmra.mxu0 %v899
        %v975 = vpop.f32.mrf.mxu0
        %v976 = vadd.f32 0.0, %v975
        %977 = vmatmul.f32.gmra.mxu0 %v900
        %v978 = vpop.f32.mrf.mxu0
        %v979 = vadd.f32 0.0, %v978
        %980 = vmatmul.f32.gmra.mxu0 %v901
        %v981 = vpop.f32.mrf.mxu0
        %v982 = vadd.f32 0.0, %v981
        %983 = vdwg.mxu0
        %v984 = vadd.f32 %v868, %v937
        %v985 = vadd.f32 %v869, %v940
        %v986 = vadd.f32 %v870, %v943
        %v987 = vadd.f32 %v871, %v946
        %v988 = vadd.f32 %v872, %v949
        %v989 = vadd.f32 %v873, %v952
        %v990 = vadd.f32 %v874, %v955
        %v991 = vadd.f32 %v875, %v958
        %v992 = vadd.f32 %v876, %v961
        %v993 = vadd.f32 %v877, %v964
        %v994 = vadd.f32 %v878, %v967
        %v995 = vadd.f32 %v879, %v970
        %v996 = vadd.f32 %v880, %v973
        %v997 = vadd.f32 %v881, %v976
        %v998 = vadd.f32 %v882, %v979
        %v999 = vadd.f32 %v883, %v982
        %s1000 = sadd.s32 %s221, 49
        %s1001 = scalar_lea.vmem %s193, %s1000 [#allocation5]
        %v1002 = vld [vmem:[%s1001] sm:$0xff]
        %v1003 = vld [vmem:[%s1001 + $0x8] sm:$0xff]
        %v1004 = vld [vmem:[%s1001 + $0x10] sm:$0xff]
        %v1005 = vld [vmem:[%s1001 + $0x18] sm:$0xff]
        %v1006 = vld [vmem:[%s1001 + $0x20] sm:$0xff]
        %v1007 = vld [vmem:[%s1001 + $0x28] sm:$0xff]
        %v1008 = vld [vmem:[%s1001 + $0x30] sm:$0xff]
        %v1009 = vld [vmem:[%s1001 + $0x38] sm:$0xff]
        %v1010 = vld [vmem:[%s1001 + $0x40] sm:$0xff]
        %v1011 = vld [vmem:[%s1001 + $0x48] sm:$0xff]
        %v1012 = vld [vmem:[%s1001 + $0x50] sm:$0xff]
        %v1013 = vld [vmem:[%s1001 + $0x58] sm:$0xff]
        %v1014 = vld [vmem:[%s1001 + $0x60] sm:$0xff]
        %v1015 = vld [vmem:[%s1001 + $0x68] sm:$0xff]
        %v1016 = vld [vmem:[%s1001 + $0x70] sm:$0xff]
        %v1017 = vld [vmem:[%s1001 + $0x78] sm:$0xff]
        %s1018 = scalar_lea.vmem %s183, 896 [#allocation2]
        %v1019 = vld [vmem:[%s1018] sm:$0xff]
        %v1020 = vld [vmem:[%s1018 + $0x8] sm:$0xff]
        %v1021 = vld [vmem:[%s1018 + $0x10] sm:$0xff]
        %v1022 = vld [vmem:[%s1018 + $0x18] sm:$0xff]
        %v1023 = vld [vmem:[%s1018 + $0x20] sm:$0xff]
        %v1024 = vld [vmem:[%s1018 + $0x28] sm:$0xff]
        %v1025 = vld [vmem:[%s1018 + $0x30] sm:$0xff]
        %v1026 = vld [vmem:[%s1018 + $0x38] sm:$0xff]
        %v1027 = vld [vmem:[%s1018 + $0x40] sm:$0xff]
        %v1028 = vld [vmem:[%s1018 + $0x48] sm:$0xff]
        %v1029 = vld [vmem:[%s1018 + $0x50] sm:$0xff]
        %v1030 = vld [vmem:[%s1018 + $0x58] sm:$0xff]
        %v1031 = vld [vmem:[%s1018 + $0x60] sm:$0xff]
        %v1032 = vld [vmem:[%s1018 + $0x68] sm:$0xff]
        %v1033 = vld [vmem:[%s1018 + $0x70] sm:$0xff]
        %v1034 = vld [vmem:[%s1018 + $0x78] sm:$0xff]
        %1035 = vmatpush.msra.mxu0 %v1034
        %1036 = vmatpush.msra.mxu0 %v1033
        %1037 = vmatpush.msra.mxu0 %v1032
        %1038 = vmatpush.msra.mxu0 %v1031
        %1039 = vmatpush.msra.mxu0 %v1030
        %1040 = vmatpush.msra.mxu0 %v1029
        %1041 = vmatpush.msra.mxu0 %v1028
        %1042 = vmatpush.msra.mxu0 %v1027
        %1043 = vmatpush.msra.mxu0 %v1026
        %1044 = vmatpush.msra.mxu0 %v1025
        %1045 = vmatpush.msra.mxu0 %v1024
        %1046 = vmatpush.msra.mxu0 %v1023
        %1047 = vmatpush.msra.mxu0 %v1022
        %1048 = vmatpush.msra.mxu0 %v1021
        %1049 = vmatpush.msra.mxu0 %v1020
        %1050 = vmatpush.msra.mxu0 %v1019
        %1051 = vmatmul.f32.gmra.mxu0 %v1002
        %v1052 = vpop.f32.mrf.mxu0
        %v1053 = vadd.f32 0.0, %v1052
        %1054 = vmatmul.f32.gmra.mxu0 %v1003
        %v1055 = vpop.f32.mrf.mxu0
        %v1056 = vadd.f32 0.0, %v1055
        %1057 = vmatmul.f32.gmra.mxu0 %v1004
        %v1058 = vpop.f32.mrf.mxu0
        %v1059 = vadd.f32 0.0, %v1058
        %1060 = vmatmul.f32.gmra.mxu0 %v1005
        %v1061 = vpop.f32.mrf.mxu0
        %v1062 = vadd.f32 0.0, %v1061
        %1063 = vmatmul.f32.gmra.mxu0 %v1006
        %v1064 = vpop.f32.mrf.mxu0
        %v1065 = vadd.f32 0.0, %v1064
        %1066 = vmatmul.f32.gmra.mxu0 %v1007
        %v1067 = vpop.f32.mrf.mxu0
        %v1068 = vadd.f32 0.0, %v1067
        %1069 = vmatmul.f32.gmra.mxu0 %v1008
        %v1070 = vpop.f32.mrf.mxu0
        %v1071 = vadd.f32 0.0, %v1070
        %1072 = vmatmul.f32.gmra.mxu0 %v1009
        %v1073 = vpop.f32.mrf.mxu0
        %v1074 = vadd.f32 0.0, %v1073
        %1075 = vmatmul.f32.gmra.mxu0 %v1010
        %v1076 = vpop.f32.mrf.mxu0
        %v1077 = vadd.f32 0.0, %v1076
        %1078 = vmatmul.f32.gmra.mxu0 %v1011
        %v1079 = vpop.f32.mrf.mxu0
        %v1080 = vadd.f32 0.0, %v1079
        %1081 = vmatmul.f32.gmra.mxu0 %v1012
        %v1082 = vpop.f32.mrf.mxu0
        %v1083 = vadd.f32 0.0, %v1082
        %1084 = vmatmul.f32.gmra.mxu0 %v1013
        %v1085 = vpop.f32.mrf.mxu0
        %v1086 = vadd.f32 0.0, %v1085
        %1087 = vmatmul.f32.gmra.mxu0 %v1014
        %v1088 = vpop.f32.mrf.mxu0
        %v1089 = vadd.f32 0.0, %v1088
        %1090 = vmatmul.f32.gmra.mxu0 %v1015
        %v1091 = vpop.f32.mrf.mxu0
        %v1092 = vadd.f32 0.0, %v1091
        %1093 = vmatmul.f32.gmra.mxu0 %v1016
        %v1094 = vpop.f32.mrf.mxu0
        %v1095 = vadd.f32 0.0, %v1094
        %1096 = vmatmul.f32.gmra.mxu0 %v1017
        %v1097 = vpop.f32.mrf.mxu0
        %v1098 = vadd.f32 0.0, %v1097
        %1099 = vdwg.mxu0
        %v1100 = vadd.f32 %v984, %v1053
        %v1101 = vadd.f32 %v985, %v1056
        %v1102 = vadd.f32 %v986, %v1059
        %v1103 = vadd.f32 %v987, %v1062
        %v1104 = vadd.f32 %v988, %v1065
        %v1105 = vadd.f32 %v989, %v1068
        %v1106 = vadd.f32 %v990, %v1071
        %v1107 = vadd.f32 %v991, %v1074
        %v1108 = vadd.f32 %v992, %v1077
        %v1109 = vadd.f32 %v993, %v1080
        %v1110 = vadd.f32 %v994, %v1083
        %v1111 = vadd.f32 %v995, %v1086
        %v1112 = vadd.f32 %v996, %v1089
        %v1113 = vadd.f32 %v997, %v1092
        %v1114 = vadd.f32 %v998, %v1095
        %v1115 = vadd.f32 %v999, %v1098
        %s1116 = sadd.s32 %s221, 50
        %s1117 = scalar_lea.vmem %s193, %s1116 [#allocation5]
        %v1118 = vld [vmem:[%s1117] sm:$0xff]
        %v1119 = vld [vmem:[%s1117 + $0x8] sm:$0xff]
        %v1120 = vld [vmem:[%s1117 + $0x10] sm:$0xff]
        %v1121 = vld [vmem:[%s1117 + $0x18] sm:$0xff]
        %v1122 = vld [vmem:[%s1117 + $0x20] sm:$0xff]
        %v1123 = vld [vmem:[%s1117 + $0x28] sm:$0xff]
        %v1124 = vld [vmem:[%s1117 + $0x30] sm:$0xff]
        %v1125 = vld [vmem:[%s1117 + $0x38] sm:$0xff]
        %v1126 = vld [vmem:[%s1117 + $0x40] sm:$0xff]
        %v1127 = vld [vmem:[%s1117 + $0x48] sm:$0xff]
        %v1128 = vld [vmem:[%s1117 + $0x50] sm:$0xff]
        %v1129 = vld [vmem:[%s1117 + $0x58] sm:$0xff]
        %v1130 = vld [vmem:[%s1117 + $0x60] sm:$0xff]
        %v1131 = vld [vmem:[%s1117 + $0x68] sm:$0xff]
        %v1132 = vld [vmem:[%s1117 + $0x70] sm:$0xff]
        %v1133 = vld [vmem:[%s1117 + $0x78] sm:$0xff]
        %s1134 = scalar_lea.vmem %s183, 1024 [#allocation2]
        %v1135 = vld [vmem:[%s1134] sm:$0xff]
        %v1136 = vld [vmem:[%s1134 + $0x8] sm:$0xff]
        %v1137 = vld [vmem:[%s1134 + $0x10] sm:$0xff]
        %v1138 = vld [vmem:[%s1134 + $0x18] sm:$0xff]
        %v1139 = vld [vmem:[%s1134 + $0x20] sm:$0xff]
        %v1140 = vld [vmem:[%s1134 + $0x28] sm:$0xff]
        %v1141 = vld [vmem:[%s1134 + $0x30] sm:$0xff]
        %v1142 = vld [vmem:[%s1134 + $0x38] sm:$0xff]
        %v1143 = vld [vmem:[%s1134 + $0x40] sm:$0xff]
        %v1144 = vld [vmem:[%s1134 + $0x48] sm:$0xff]
        %v1145 = vld [vmem:[%s1134 + $0x50] sm:$0xff]
        %v1146 = vld [vmem:[%s1134 + $0x58] sm:$0xff]
        %v1147 = vld [vmem:[%s1134 + $0x60] sm:$0xff]
        %v1148 = vld [vmem:[%s1134 + $0x68] sm:$0xff]
        %v1149 = vld [vmem:[%s1134 + $0x70] sm:$0xff]
        %v1150 = vld [vmem:[%s1134 + $0x78] sm:$0xff]
        %1151 = vmatpush.msra.mxu0 %v1150
        %1152 = vmatpush.msra.mxu0 %v1149
        %1153 = vmatpush.msra.mxu0 %v1148
        %1154 = vmatpush.msra.mxu0 %v1147
        %1155 = vmatpush.msra.mxu0 %v1146
        %1156 = vmatpush.msra.mxu0 %v1145
        %1157 = vmatpush.msra.mxu0 %v1144
        %1158 = vmatpush.msra.mxu0 %v1143
        %1159 = vmatpush.msra.mxu0 %v1142
        %1160 = vmatpush.msra.mxu0 %v1141
        %1161 = vmatpush.msra.mxu0 %v1140
        %1162 = vmatpush.msra.mxu0 %v1139
        %1163 = vmatpush.msra.mxu0 %v1138
        %1164 = vmatpush.msra.mxu0 %v1137
        %1165 = vmatpush.msra.mxu0 %v1136
        %1166 = vmatpush.msra.mxu0 %v1135
        %1167 = vmatmul.f32.gmra.mxu0 %v1118
        %v1168 = vpop.f32.mrf.mxu0
        %v1169 = vadd.f32 0.0, %v1168
        %1170 = vmatmul.f32.gmra.mxu0 %v1119
        %v1171 = vpop.f32.mrf.mxu0
        %v1172 = vadd.f32 0.0, %v1171
        %1173 = vmatmul.f32.gmra.mxu0 %v1120
        %v1174 = vpop.f32.mrf.mxu0
        %v1175 = vadd.f32 0.0, %v1174
        %1176 = vmatmul.f32.gmra.mxu0 %v1121
        %v1177 = vpop.f32.mrf.mxu0
        %v1178 = vadd.f32 0.0, %v1177
        %1179 = vmatmul.f32.gmra.mxu0 %v1122
        %v1180 = vpop.f32.mrf.mxu0
        %v1181 = vadd.f32 0.0, %v1180
        %1182 = vmatmul.f32.gmra.mxu0 %v1123
        %v1183 = vpop.f32.mrf.mxu0
        %v1184 = vadd.f32 0.0, %v1183
        %1185 = vmatmul.f32.gmra.mxu0 %v1124
        %v1186 = vpop.f32.mrf.mxu0
        %v1187 = vadd.f32 0.0, %v1186
        %1188 = vmatmul.f32.gmra.mxu0 %v1125
        %v1189 = vpop.f32.mrf.mxu0
        %v1190 = vadd.f32 0.0, %v1189
        %1191 = vmatmul.f32.gmra.mxu0 %v1126
        %v1192 = vpop.f32.mrf.mxu0
        %v1193 = vadd.f32 0.0, %v1192
        %1194 = vmatmul.f32.gmra.mxu0 %v1127
        %v1195 = vpop.f32.mrf.mxu0
        %v1196 = vadd.f32 0.0, %v1195
        %1197 = vmatmul.f32.gmra.mxu0 %v1128
        %v1198 = vpop.f32.mrf.mxu0
        %v1199 = vadd.f32 0.0, %v1198
        %1200 = vmatmul.f32.gmra.mxu0 %v1129
        %v1201 = vpop.f32.mrf.mxu0
        %v1202 = vadd.f32 0.0, %v1201
        %1203 = vmatmul.f32.gmra.mxu0 %v1130
        %v1204 = vpop.f32.mrf.mxu0
        %v1205 = vadd.f32 0.0, %v1204
        %1206 = vmatmul.f32.gmra.mxu0 %v1131
        %v1207 = vpop.f32.mrf.mxu0
        %v1208 = vadd.f32 0.0, %v1207
        %1209 = vmatmul.f32.gmra.mxu0 %v1132
        %v1210 = vpop.f32.mrf.mxu0
        %v1211 = vadd.f32 0.0, %v1210
        %1212 = vmatmul.f32.gmra.mxu0 %v1133
        %v1213 = vpop.f32.mrf.mxu0
        %v1214 = vadd.f32 0.0, %v1213
        %1215 = vdwg.mxu0
        %v1216 = vadd.f32 %v1100, %v1169
        %v1217 = vadd.f32 %v1101, %v1172
        %v1218 = vadd.f32 %v1102, %v1175
        %v1219 = vadd.f32 %v1103, %v1178
        %v1220 = vadd.f32 %v1104, %v1181
        %v1221 = vadd.f32 %v1105, %v1184
        %v1222 = vadd.f32 %v1106, %v1187
        %v1223 = vadd.f32 %v1107, %v1190
        %v1224 = vadd.f32 %v1108, %v1193
        %v1225 = vadd.f32 %v1109, %v1196
        %v1226 = vadd.f32 %v1110, %v1199
        %v1227 = vadd.f32 %v1111, %v1202
        %v1228 = vadd.f32 %v1112, %v1205
        %v1229 = vadd.f32 %v1113, %v1208
        %v1230 = vadd.f32 %v1114, %v1211
        %v1231 = vadd.f32 %v1115, %v1214
        %v1232 = vmul.f32 %v1216, 0.5
        %v1233 = vmul.f32 %v1217, 0.5
        %v1234 = vmul.f32 %v1218, 0.5
        %v1235 = vmul.f32 %v1219, 0.5
        %v1236 = vmul.f32 %v1220, 0.5
        %v1237 = vmul.f32 %v1221, 0.5
        %v1238 = vmul.f32 %v1222, 0.5
        %v1239 = vmul.f32 %v1223, 0.5
        %v1240 = vmul.f32 %v1224, 0.5
        %v1241 = vmul.f32 %v1225, 0.5
        %v1242 = vmul.f32 %v1226, 0.5
        %v1243 = vmul.f32 %v1227, 0.5
        %v1244 = vmul.f32 %v1228, 0.5
        %v1245 = vmul.f32 %v1229, 0.5
        %v1246 = vmul.f32 %v1230, 0.5
        %v1247 = vmul.f32 %v1231, 0.5
        %v1248 = vtanh.pop %v1232
        %v1249 = vtanh.pop %v1233
        %v1250 = vtanh.pop %v1234
        %v1251 = vtanh.pop %v1235
        %v1252 = vtanh.pop %v1236
        %v1253 = vtanh.pop %v1237
        %v1254 = vtanh.pop %v1238
        %v1255 = vtanh.pop %v1239
        %v1256 = vtanh.pop %v1240
        %v1257 = vtanh.pop %v1241
        %v1258 = vtanh.pop %v1242
        %v1259 = vtanh.pop %v1243
        %v1260 = vtanh.pop %v1244
        %v1261 = vtanh.pop %v1245
        %v1262 = vtanh.pop %v1246
        %v1263 = vtanh.pop %v1247
        %v1264 = vmul.f32 %v1248, 0.5
        %v1265 = vmul.f32 %v1249, 0.5
        %v1266 = vmul.f32 %v1250, 0.5
        %v1267 = vmul.f32 %v1251, 0.5
        %v1268 = vmul.f32 %v1252, 0.5
        %v1269 = vmul.f32 %v1253, 0.5
        %v1270 = vmul.f32 %v1254, 0.5
        %v1271 = vmul.f32 %v1255, 0.5
        %v1272 = vmul.f32 %v1256, 0.5
        %v1273 = vmul.f32 %v1257, 0.5
        %v1274 = vmul.f32 %v1258, 0.5
        %v1275 = vmul.f32 %v1259, 0.5
        %v1276 = vmul.f32 %v1260, 0.5
        %v1277 = vmul.f32 %v1261, 0.5
        %v1278 = vmul.f32 %v1262, 0.5
        %v1279 = vmul.f32 %v1263, 0.5
        %v1280 = vadd.f32 %v1264, 0.5
        %v1281 = vadd.f32 %v1265, 0.5
        %v1282 = vadd.f32 %v1266, 0.5
        %v1283 = vadd.f32 %v1267, 0.5
        %v1284 = vadd.f32 %v1268, 0.5
        %v1285 = vadd.f32 %v1269, 0.5
        %v1286 = vadd.f32 %v1270, 0.5
        %v1287 = vadd.f32 %v1271, 0.5
        %v1288 = vadd.f32 %v1272, 0.5
        %v1289 = vadd.f32 %v1273, 0.5
        %v1290 = vadd.f32 %v1274, 0.5
        %v1291 = vadd.f32 %v1275, 0.5
        %v1292 = vadd.f32 %v1276, 0.5
        %v1293 = vadd.f32 %v1277, 0.5
        %v1294 = vadd.f32 %v1278, 0.5
        %v1295 = vadd.f32 %v1279, 0.5
        %v1296 = vmul.f32 %v1216, %v1280
        %v1297 = vmul.f32 %v1217, %v1281
        %v1298 = vmul.f32 %v1218, %v1282
        %v1299 = vmul.f32 %v1219, %v1283
        %v1300 = vmul.f32 %v1220, %v1284
        %v1301 = vmul.f32 %v1221, %v1285
        %v1302 = vmul.f32 %v1222, %v1286
        %v1303 = vmul.f32 %v1223, %v1287
        %v1304 = vmul.f32 %v1224, %v1288
        %v1305 = vmul.f32 %v1225, %v1289
        %v1306 = vmul.f32 %v1226, %v1290
        %v1307 = vmul.f32 %v1227, %v1291
        %v1308 = vmul.f32 %v1228, %v1292
        %v1309 = vmul.f32 %v1229, %v1293
        %v1310 = vmul.f32 %v1230, %v1294
        %v1311 = vmul.f32 %v1231, %v1295
        %1312 = vst [vmem:[%s219] sm:$0xff] %v1296
        %1313 = vst [vmem:[%s219 + $0x8] sm:$0xff] %v1297
        %1314 = vst [vmem:[%s219 + $0x10] sm:$0xff] %v1298
        %1315 = vst [vmem:[%s219 + $0x18] sm:$0xff] %v1299
        %1316 = vst [vmem:[%s219 + $0x20] sm:$0xff] %v1300
        %1317 = vst [vmem:[%s219 + $0x28] sm:$0xff] %v1301
        %1318 = vst [vmem:[%s219 + $0x30] sm:$0xff] %v1302
        %1319 = vst [vmem:[%s219 + $0x38] sm:$0xff] %v1303
        %1320 = vst [vmem:[%s219 + $0x40] sm:$0xff] %v1304
        %1321 = vst [vmem:[%s219 + $0x48] sm:$0xff] %v1305
        %1322 = vst [vmem:[%s219 + $0x50] sm:$0xff] %v1306
        %1323 = vst [vmem:[%s219 + $0x58] sm:$0xff] %v1307
        %1324 = vst [vmem:[%s219 + $0x60] sm:$0xff] %v1308
        %1325 = vst [vmem:[%s219 + $0x68] sm:$0xff] %v1309
        %1326 = vst [vmem:[%s219 + $0x70] sm:$0xff] %v1310
        %1327 = vst [vmem:[%s219 + $0x78] sm:$0xff] %v1311
        %s1328 = sand.u32 %s96, 1
        %s1329 = scalar_lea.sflag [#allocation4], %s1328
        %s1330 = sand.u32 %s96, 1
        %s1331 = smul.addr %s1330, 128
        %s1332 = scalar_lea.vmem [#allocation7], %s1331
        // Predicated region
        $region37: #{tpu_custom_call.1} parent=27 // pred_check
          %p1333 = pneg %p106
        $region38: #{tpu_custom_call.1} parent=27 // pred_check_branch
          %1335 = sbr.rel (%p1333) target = $region40
        $region39: #{tpu_custom_call.1} parent=27 // pred_region
          %s1336 = smul.u32 16, %s27
          %1338 = vsyncadd %s1329, 0
          %s1339 = smul.addr %s26, 48
          %s1340 = sadd.s32 %s1336, %s1339
          %s1341 = smul.addr %s1340, 8
          %s1342 = scalar_lea.hbm %s2, %s1341
          %s1343 = sshll.u32 %s1332, 4
          %s1344 = int_to_ptr.vmem [resolvable:$true] %s1343
          %s1345 = sshll.u32 %s1342, 4
          %s1346 = int_to_ptr.hbm [resolvable:$true] %s1345
          %1351 = dma.vmem_to_hbm [thread:$0]  %s1344, 2048, %s1346, %s1329, 128, 128, 8
        $region40: #{tpu_custom_call.1} parent=27 // pred_fallthru
          _
      $region28: #{tpu_custom_call.1} parent=5 // pred_fallthru
        _
      %p1352 = scmp.le.s32.totalorder 2, %s17
      // Predicated region
      $region41: #{tpu_custom_call.1} parent=5 // pred_check
        %p1353 = pneg %p1352
      $region42: #{tpu_custom_call.1} parent=5 // pred_check_branch
        %1355 = sbr.rel (%p1353) target = $region44
      $region43: #{tpu_custom_call.1} parent=5 // pred_region
        %s1356 = ssub.s32 %s17, 2
        // Predicated region
        $region45: #{tpu_custom_call.1} parent=43 // pred_check
          %p1357 = pneg %p112
        $region46: #{tpu_custom_call.1} parent=43 // pred_check_branch
          %1359 = sbr.rel (%p1357) target = $region48
        $region47: #{tpu_custom_call.1} parent=43 // pred_region
          %s1360 = sand.u32 %s97, 1
          %s1361 = scalar_lea.sflag [#allocation4], %s1360
          %s1362 = sand.u32 %s97, 1
          %s1363 = smul.addr %s1362, 128
          %s1364 = scalar_lea.vmem [#allocation7], %s1363
          %1366 = dma.done %s1361, 2048
        $region48: #{tpu_custom_call.1} parent=43 // pred_fallthru
          _
      $region44: #{tpu_custom_call.1} parent=5 // pred_fallthru
        _
    $region6: #{tpu_custom_call.1} parent=1 // loop_footer
      %s21 = sadd.s32 1, %s17
    $region7: #{tpu_custom_call.1} parent=1 // loop_footer_branch
      %16 = sbr.rel target = $region3
    $region8: #{tpu_custom_call.1} parent=1 // loop_exit
      _
    %1367 = vsyncpa [#allocation3], 1
    %s1368 = scalar_lea.sflag [#allocation3], 1
    %1369 = vsyncpa %s1368, 1
    %1370 = vsyncpa [#allocation6], 1
    %s1371 = scalar_lea.sflag [#allocation6], 1
    %1372 = vsyncpa %s1371, 1
    %1373 = vsyncpa [#allocation4], 1
    %s1374 = scalar_lea.sflag [#allocation4], 1
    %1375 = vsyncpa %s1374, 1

</llo_original>
